<compile_context>
chip_gen: v7x
topology: tpu7x:2x2x1
jax: 0.10.0
libtpu: 0.0.40
codegen_flags: <defaults>
</compile_context>

<pallas_src>
import jax
import jax.numpy as jnp
from jax.experimental import pallas as pl
from jax.experimental.pallas import tpu as pltpu


# ---------------------------------------------------------------------------
# Fused forward kernel (one batch tile of TB images per grid step).
# Internal activation layout: rows ordered (spatial_row, batch) with the batch
# innermost in groups of TB, so every row-window / pool / fc1 selection is a
# contiguous, sublane-aligned static slice.
# ---------------------------------------------------------------------------
def _cnn_fused_kernel(x_ref, m1_ref, b1_ref, m2_ref, b2_ref,
                      wfc1_ref, bfc1_ref, wfc2_ref, bfc2_ref, o_ref):
    tb = x_ref.shape[1]          # batch-tile size (batch sits on sublanes)
    f32 = jnp.float32
    cdt = m1_ref.dtype           # bf16 MXU compute dtype

    xv = x_ref[...]              # (28, tb, 28) bf16, layout (H, batch, W)

    # ---- conv1 + folded bn1: one banded matmul, K = 5*28 = 140 ------------
    # lane-concat the 5 shifted row windows -> (24*tb, 140); columns of the
    # result are parity-packed: col = parity(ow)*256 + (ow//2)*16 + co.
    xcat = jnp.concatenate(
        [xv[i:i + 24].reshape(24 * tb, 28) for i in range(5)], axis=1)
    out1 = jnp.dot(xcat, m1_ref[...], preferred_element_type=f32) + b1_ref[...]
    # out1: (24*tb, 512) f32

    # ---- max_pool2d(2) + ReLU (torch order: bn -> pool -> relu) ------------
    cp1 = jnp.maximum(out1[:, :256], out1[:, 256:])          # col pool (aligned halves)
    c4 = cp1.reshape(12, 2, tb, 256)
    rp1 = jnp.maximum(c4[:, 0], c4[:, 1]).reshape(12 * tb, 256)   # row pool
    p1 = jnp.maximum(rp1, 0.0).astype(cdt)                   # (12*tb, 256) bf16, one cast

    # ---- conv2 + folded bn2 (Dropout2d: identity in eval mode) -------------
    # K = 256 (192 real pooled columns + 64 zero-pad); output columns are
    # parity-packed: col = parity(ow)*128 + (ow//2)*32 + co.
    acc = None
    for i in range(5):
        lhs = p1[i * tb:(i + 8) * tb]                         # (8*tb, 256) bf16
        d = jnp.dot(lhs, m2_ref[i], preferred_element_type=f32)
        acc = d if acc is None else acc + d
    out2 = acc + b2_ref[...]                                  # (8*tb, 256) f32

    cp2 = jnp.maximum(out2[:, :128], out2[:, 128:])           # col pool
    c4b = cp2.reshape(4, 2, tb, 128)
    rp2 = jnp.maximum(c4b[:, 0], c4b[:, 1]).reshape(4 * tb, 128)  # row pool
    p2 = jnp.maximum(rp2, 0.0).astype(cdt)                    # (4*tb, 128) bf16, one cast

    # ---- fc1 + ReLU (channel-major PyTorch flatten folded into wfc1) -------
    acc = None
    for oh in range(4):
        d = jnp.dot(p2[oh * tb:(oh + 1) * tb], wfc1_ref[oh],
                    preferred_element_type=f32)
        acc = d if acc is None else acc + d
    fc1 = jnp.maximum(acc + bfc1_ref[...], 0.0)               # (tb, 128) f32

    # ---- fc2 (fc1_drop: identity in eval) + log_softmax --------------------
    # fc2 is padded to 128 lane-dense output columns (pad bias = -1e30), so
    # the reductions and the store below are full, unmasked vregs.
    logits = jnp.dot(fc1.astype(cdt), wfc2_ref[...],
                     preferred_element_type=f32) + bfc2_ref[...]   # (tb, 128)
    m = jnp.max(logits, axis=-1, keepdims=True)
    s = logits - m
    lse = jnp.log(jnp.sum(jnp.exp(s), axis=-1, keepdims=True))
    o_ref[...] = (s - lse).astype(o_ref.dtype)


# ---------------------------------------------------------------------------
# One-time parameter preparation (BN folding, banded conv matrices with
# parity-packed output columns, flatten permutation folded into fc1, fc2
# padded to 128 lanes) -- all hoisted out of the forward path.
# ---------------------------------------------------------------------------
def _band(out_w, in_w, k):
    # P[ow, w, kw] = 1 if w == ow + kw else 0
    ow = jnp.arange(out_w)[:, None, None]
    w = jnp.arange(in_w)[None, :, None]
    kw = jnp.arange(k)[None, None, :]
    return (w == ow + kw).astype(jnp.float32)


def prepare_params(params, compute_dtype=jnp.bfloat16, eps=1e-5):
    f32 = jnp.float32
    scale1 = params["bn1_gamma"] / jnp.sqrt(params["bn1_var"] + eps)
    shift1 = (params["conv1_b"] - params["bn1_mean"]) * scale1 + params["bn1_beta"]
    scale2 = params["bn2_gamma"] / jnp.sqrt(params["bn2_var"] + eps)
    shift2 = (params["conv2_b"] - params["bn2_mean"]) * scale2 + params["bn2_beta"]

    # conv1 banded weights, output columns parity-packed:
    #   col = parity(ow)*256 + (ow//2)*16 + co   (each parity half padded 192->256)
    # K-consolidated over the 5 kernel rows -> (140, 512).
    w1f = params["conv1_w"] * scale1[:, None, None, None]            # (16,1,5,5)
    m1 = jnp.einsum("pwk,chk->hwpc", _band(24, 28, 5), w1f[:, 0])    # (5,28,24,16)
    m1 = m1.reshape(5, 28, 12, 2, 16).transpose(0, 1, 3, 2, 4)       # (5,28,par,j,co)
    m1 = jnp.pad(m1.reshape(5, 28, 2, 192), ((0, 0), (0, 0), (0, 0), (0, 64)))
    m1 = m1.reshape(5, 28, 512).reshape(140, 512).astype(compute_dtype)

    b1 = jnp.concatenate([jnp.pad(jnp.tile(shift1, 12), (0, 64))] * 2)  # (512,)

    # conv2 banded weights: K index = j*16+ci (pooled width, channel) padded
    # 192->256; output columns parity-packed: col = parity(ow)*128 + (ow//2)*32 + co.
    w2f = params["conv2_w"] * scale2[:, None, None, None]            # (32,16,5,5)
    m2 = jnp.einsum("pwk,cihk->hwipc", _band(8, 12, 5), w2f)         # (5,12,16,8,32)
    m2 = m2.reshape(5, 12, 16, 4, 2, 32).transpose(0, 1, 2, 4, 3, 5)  # (..,par,jo,co)
    m2 = m2.reshape(5, 192, 256)
    m2 = jnp.pad(m2, ((0, 0), (0, 64), (0, 0))).astype(compute_dtype)  # (5,256,256)

    b2 = jnp.concatenate([jnp.tile(shift2, 4)] * 2)                  # (256,)

    # fc1: absorb the channel-major flatten (k = co*16 + oh*4 + ow) into the
    # column order expected by the kernel's (ow*32+co) activation packing.
    wfc1 = params["fc1_w"].reshape(128, 32, 4, 4)                    # (n, co, oh, ow)
    wfc1 = jnp.transpose(wfc1, (2, 3, 1, 0)).reshape(4, 128, 128)    # (oh,(ow,co),n)

    # fc2 padded to 128 lane-dense output columns; pad bias -> -1e30 so the
    # pad columns vanish in the log_softmax.
    wfc2 = jnp.pad(params["fc2_w"].T.astype(f32), ((0, 0), (0, 102)))
    bfc2 = jnp.pad(params["fc2_b"].astype(f32), (0, 102), constant_values=-1e30)

    return {
        "m1": m1,
        "b1": b1[None, :].astype(f32),                                # (1, 512)
        "m2": m2,
        "b2": b2[None, :].astype(f32),                                # (1, 256)
        "wfc1": wfc1.astype(compute_dtype),
        "bfc1": params["fc1_b"][None, :].astype(f32),
        "wfc2": wfc2.astype(compute_dtype),                           # (128, 128)
        "bfc2": bfc2[None, :],                                        # (1, 128)
    }


def _round_up(x, m):
    return ((x + m - 1) // m) * m


# ---------------------------------------------------------------------------
# Forward wrapper: one pallas_call, grid over batch tiles
# ---------------------------------------------------------------------------
def make_cnn_forward(tb=128):
    @jax.jit
    def forward(x_nchw, packed):
        b = x_nchw.shape[0]
        x = x_nchw.reshape(b, 28, 28)
        # (H, B, W) layout so every in-kernel row selection is a contiguous
        # sublane block; cast to bf16 here so the relayout and the MXU-input
        # cast are a single fused XLA pass and input HBM traffic is halved.
        # TODO(synk): fold this relayout into the pallas_call input DMA
        # (allow_input_fusion) to avoid the extra HBM round trip entirely.
        x_t = jnp.transpose(x, (1, 0, 2)).astype(jnp.bfloat16)       # (28, B, 28)

        tb_eff = min(tb, _round_up(b, 8))      # keep small batches cheap
        b_pad = _round_up(b, tb_eff)
        if b_pad != b:
            x_t = jnp.pad(x_t, ((0, 0), (0, b_pad - b), (0, 0)))
        n_tiles = b_pad // tb_eff

        out = pl.pallas_call(
            _cnn_fused_kernel,
            out_shape=jax.ShapeDtypeStruct((b_pad, 128), jnp.float32),
            grid=(n_tiles,),
            in_specs=[
                pl.BlockSpec((28, tb_eff, 28), lambda i: (0, i, 0)),  # input tile
                pl.BlockSpec((140, 512), lambda i: (0, 0)),           # conv1 bands (K-concat)
                pl.BlockSpec((1, 512), lambda i: (0, 0)),             # conv1/bn1 bias
                pl.BlockSpec((5, 256, 256), lambda i: (0, 0, 0)),     # conv2 bands
                pl.BlockSpec((1, 256), lambda i: (0, 0)),             # conv2/bn2 bias
                pl.BlockSpec((4, 128, 128), lambda i: (0, 0, 0)),     # fc1 (per oh)
                pl.BlockSpec((1, 128), lambda i: (0, 0)),             # fc1 bias
                pl.BlockSpec((128, 128), lambda i: (0, 0)),           # fc2 (padded)
                pl.BlockSpec((1, 128), lambda i: (0, 0)),             # fc2 bias (padded)
            ],
            out_specs=pl.BlockSpec((tb_eff, 128), lambda i: (i, 0)),
            compiler_params=pltpu.CompilerParams(
                dimension_semantics=("parallel",),
                vmem_limit_bytes=40 * 1024 * 1024,
            ),
        )(x_t, packed["m1"], packed["b1"], packed["m2"], packed["b2"],
          packed["wfc1"], packed["bfc1"], packed["wfc2"], packed["bfc2"])
        return out[:b, :26]

    return forward


# ---------------------------------------------------------------------------
# Pure-JAX/XLA reference (eval-mode semantics of the PyTorch module)
# ---------------------------------------------------------------------------
def reference_forward(x_nchw, params, eps=1e-5):
    x = x_nchw.astype(jnp.float32)

    def conv(y, w, bias):
        y = jax.lax.conv_general_dilated(
            y, w, (1, 1), "VALID", dimension_numbers=("NCHW", "OIHW", "NCHW"))
        return y + bias[None, :, None, None]

    def bn(y, g, beta, mean, var):
        return (y - mean[None, :, None, None]) * (
            g[None, :, None, None] / jnp.sqrt(var[None, :, None, None] + eps)
        ) + beta[None, :, None, None]

    def pool(y):
        return jax.lax.reduce_window(y, -jnp.inf, jax.lax.max,
                                     (1, 1, 2, 2), (1, 1, 2, 2), "VALID")

    y = conv(x, params["conv1_w"], params["conv1_b"])
    y = jnp.maximum(pool(bn(y, params["bn1_gamma"], params["bn1_beta"],
                            params["bn1_mean"], params["bn1_var"])), 0.0)
    y = conv(y, params["conv2_w"], params["conv2_b"])
    y = jnp.maximum(pool(bn(y, params["bn2_gamma"], params["bn2_beta"],
                            params["bn2_mean"], params["bn2_var"])), 0.0)
    y = y.reshape(y.shape[0], -1)                        # (B, 512) channel-major
    y = jnp.maximum(y @ params["fc1_w"].T + params["fc1_b"], 0.0)
    logits = y @ params["fc2_w"].T + params["fc2_b"]
    return jax.nn.log_softmax(logits, axis=-1)


def init_params(key):
    ks = jax.random.split(key, 12)
    f32 = jnp.float32
    return {
        "conv1_w": (jax.random.normal(ks[0], (16, 1, 5, 5)) * 0.1).astype(f32),
        "conv1_b": (jax.random.normal(ks[1], (16,)) * 0.1).astype(f32),
        "bn1_gamma": (1.0 + 0.1 * jax.random.normal(ks[8], (16,))).astype(f32),
        "bn1_beta": (0.1 * jax.random.normal(ks[9], (16,))).astype(f32),
        "bn1_mean": (0.1 * jax.random.normal(ks[10], (16,))).astype(f32),
        "bn1_var": jax.random.uniform(ks[11], (16,), minval=0.5, maxval=1.5).astype(f32),
        "conv2_w": (jax.random.normal(ks[2], (32, 16, 5, 5)) * 0.05).astype(f32),
        "conv2_b": (jax.random.normal(ks[3], (32,)) * 0.1).astype(f32),
        "bn2_gamma": (1.0 + 0.1 * jax.random.normal(ks[8], (32,))).astype(f32),
        "bn2_beta": (0.1 * jax.random.normal(ks[9], (32,))).astype(f32),
        "bn2_mean": (0.1 * jax.random.normal(ks[10], (32,))).astype(f32),
        "bn2_var": jax.random.uniform(ks[11], (32,), minval=0.5, maxval=1.5).astype(f32),
        "fc1_w": (jax.random.normal(ks[4], (128, 512)) * 0.05).astype(f32),
        "fc1_b": (jax.random.normal(ks[5], (128,)) * 0.1).astype(f32),
        "fc2_w": (jax.random.normal(ks[6], (26, 128)) * 0.05).astype(f32),
        "fc2_b": (jax.random.normal(ks[7], (26,)) * 0.1).astype(f32),
    }


if __name__ == "__main__":
    key = jax.random.PRNGKey(0)
    pkey, xkey, xkey2 = jax.random.split(key, 3)
    params = init_params(pkey)
    packed = prepare_params(params, compute_dtype=jnp.bfloat16)
    forward = make_cnn_forward(tb=128)

    # 28x28 input is implied by flattened_size = 32*4*4 (two k=5 convs + two 2x2 pools)
    x = jax.random.normal(xkey, (2, 1, 28, 28), dtype=jnp.float32)
    out = jax.block_until_ready(forward(x, packed))
    assert out.shape == (2, 26), out.shape

    # log_softmax rows exponentiate to ~1
    row_sums = jnp.sum(jnp.exp(out), axis=1)
    assert bool(jnp.all(jnp.abs(row_sums - 1.0) < 1e-3)), row_sums

    # numeric check against a pure-XLA reference (loose tol: bf16 MXU path)
    ref = jax.block_until_ready(reference_forward(x, params))
    max_err = float(jnp.max(jnp.abs(out - ref)))
    assert max_err < 0.25, max_err

    # larger batch: exercises the tb=128 tile, batch padding and a 2-step grid
    x2 = jax.random.normal(xkey2, (200, 1, 28, 28), dtype=jnp.float32)
    out2 = jax.block_until_ready(forward(x2, packed))
    assert out2.shape == (200, 26), out2.shape
    ref2 = jax.block_until_ready(reference_forward(x2, params))
    max_err2 = float(jnp.max(jnp.abs(out2 - ref2)))
    assert max_err2 < 0.25, max_err2

    print("KERNEL_OK")
</pallas_src>

<mosaic_0001>
module attributes {stable_mosaic.version = 11 : i64} {
  func.func @_cnn_fused_kernel(%arg0: i32, %arg1: memref<28x8x28xbf16, #tpu.memory_space<vmem>>, %arg2: memref<140x512xbf16, #tpu.memory_space<vmem>>, %arg3: memref<1x512xf32, #tpu.memory_space<vmem>>, %arg4: memref<5x256x256xbf16, #tpu.memory_space<vmem>>, %arg5: memref<1x256xf32, #tpu.memory_space<vmem>>, %arg6: memref<4x128x128xbf16, #tpu.memory_space<vmem>>, %arg7: memref<1x128xf32, #tpu.memory_space<vmem>>, %arg8: memref<128x128xbf16, #tpu.memory_space<vmem>>, %arg9: memref<1x128xf32, #tpu.memory_space<vmem>>, %arg10: memref<8x128xf32, #tpu.memory_space<vmem>>) attributes {dimension_semantics = [#tpu.dimension_semantics<parallel>], iteration_bounds = array<i64: 1>, scalar_prefetch = 0 : i64, scratch_operands = 0 : i64, tpu.core_type = #tpu.core_type<tc>, window_params = [{transform_indices = @transform_0, window_bounds = array<i64: 28, 8, 28>}, {pipeline_mode = #tpu.pipeline_mode<synchronous>, transform_indices = @transform_1, window_bounds = array<i64: 140, 512>}, {pipeline_mode = #tpu.pipeline_mode<synchronous>, transform_indices = @transform_2, window_bounds = array<i64: 1, 512>}, {pipeline_mode = #tpu.pipeline_mode<synchronous>, transform_indices = @transform_3, window_bounds = array<i64: 5, 256, 256>}, {pipeline_mode = #tpu.pipeline_mode<synchronous>, transform_indices = @transform_4, window_bounds = array<i64: 1, 256>}, {pipeline_mode = #tpu.pipeline_mode<synchronous>, transform_indices = @transform_5, window_bounds = array<i64: 4, 128, 128>}, {pipeline_mode = #tpu.pipeline_mode<synchronous>, transform_indices = @transform_6, window_bounds = array<i64: 1, 128>}, {pipeline_mode = #tpu.pipeline_mode<synchronous>, transform_indices = @transform_7, window_bounds = array<i64: 128, 128>}, {pipeline_mode = #tpu.pipeline_mode<synchronous>, transform_indices = @transform_8, window_bounds = array<i64: 1, 128>}, {transform_indices = @transform_9, window_bounds = array<i64: 8, 128>}]} {
    %c0 = arith.constant 0 : index
    %c0_0 = arith.constant 0 : index
    %c0_1 = arith.constant 0 : index
    %0 = vector.load %arg1[%c0, %c0_0, %c0_1] : memref<28x8x28xbf16, #tpu.memory_space<vmem>>, vector<28x8x28xbf16>
    %1 = vector.extract_strided_slice %0 {offsets = [0, 0, 0], sizes = [24, 8, 28], strides = [1, 1, 1]} : vector<28x8x28xbf16> to vector<24x8x28xbf16>
    %2 = vector.shape_cast %1 : vector<24x8x28xbf16> to vector<192x28xbf16>
    %3 = vector.extract_strided_slice %0 {offsets = [1, 0, 0], sizes = [24, 8, 28], strides = [1, 1, 1]} : vector<28x8x28xbf16> to vector<24x8x28xbf16>
    %4 = vector.shape_cast %3 : vector<24x8x28xbf16> to vector<192x28xbf16>
    %5 = vector.extract_strided_slice %0 {offsets = [2, 0, 0], sizes = [24, 8, 28], strides = [1, 1, 1]} : vector<28x8x28xbf16> to vector<24x8x28xbf16>
    %6 = vector.shape_cast %5 : vector<24x8x28xbf16> to vector<192x28xbf16>
    %7 = vector.extract_strided_slice %0 {offsets = [3, 0, 0], sizes = [24, 8, 28], strides = [1, 1, 1]} : vector<28x8x28xbf16> to vector<24x8x28xbf16>
    %8 = vector.shape_cast %7 : vector<24x8x28xbf16> to vector<192x28xbf16>
    %9 = vector.extract_strided_slice %0 {offsets = [4, 0, 0], sizes = [24, 8, 28], strides = [1, 1, 1]} : vector<28x8x28xbf16> to vector<24x8x28xbf16>
    %10 = vector.shape_cast %9 : vector<24x8x28xbf16> to vector<192x28xbf16>
    %11 = tpu.concatenate %2, %4, %6, %8, %10 in 1 : vector<192x28xbf16>, vector<192x28xbf16>, vector<192x28xbf16>, vector<192x28xbf16>, vector<192x28xbf16> -> vector<192x140xbf16>
    %c0_2 = arith.constant 0 : index
    %c0_3 = arith.constant 0 : index
    %12 = vector.load %arg2[%c0_2, %c0_3] : memref<140x512xbf16, #tpu.memory_space<vmem>>, vector<140x512xbf16>
    %cst = arith.constant dense<0.000000e+00> : vector<192x512xf32>
    %13 = tpu.matmul %11, %12, %cst {dimension_numbers = #tpu.dot_dimension_numbers<[1], [0], [0], [1], [0, 0, 1, 1], [], []>} : vector<192x140xbf16>, vector<140x512xbf16>, vector<192x512xf32> -> vector<192x512xf32>
    %c0_4 = arith.constant 0 : index
    %c0_5 = arith.constant 0 : index
    %14 = vector.load %arg3[%c0_4, %c0_5] : memref<1x512xf32, #tpu.memory_space<vmem>>, vector<1x512xf32>
    %15 = vector.broadcast %14 : vector<1x512xf32> to vector<192x512xf32>
    %16 = arith.addf %13, %15 : vector<192x512xf32>
    %17 = vector.extract_strided_slice %16 {offsets = [0, 0], sizes = [192, 256], strides = [1, 1]} : vector<192x512xf32> to vector<192x256xf32>
    %18 = vector.extract_strided_slice %16 {offsets = [0, 256], sizes = [192, 256], strides = [1, 1]} : vector<192x512xf32> to vector<192x256xf32>
    %19 = arith.maximumf %17, %18 : vector<192x256xf32>
    %20 = vector.shape_cast %19 : vector<192x256xf32> to vector<12x2x8x256xf32>
    %21 = vector.extract_strided_slice %20 {offsets = [0, 0, 0, 0], sizes = [12, 1, 8, 256], strides = [1, 1, 1, 1]} : vector<12x2x8x256xf32> to vector<12x1x8x256xf32>
    %22 = vector.shape_cast %21 : vector<12x1x8x256xf32> to vector<12x8x256xf32>
    %23 = vector.extract_strided_slice %20 {offsets = [0, 1, 0, 0], sizes = [12, 1, 8, 256], strides = [1, 1, 1, 1]} : vector<12x2x8x256xf32> to vector<12x1x8x256xf32>
    %24 = vector.shape_cast %23 : vector<12x1x8x256xf32> to vector<12x8x256xf32>
    %25 = arith.maximumf %22, %24 : vector<12x8x256xf32>
    %26 = vector.shape_cast %25 : vector<12x8x256xf32> to vector<96x256xf32>
    %cst_6 = arith.constant 0.000000e+00 : f32
    %27 = vector.broadcast %cst_6 : f32 to vector<96x256xf32>
    %28 = arith.maximumf %26, %27 : vector<96x256xf32>
    %29 = arith.truncf %28 : vector<96x256xf32> to vector<96x256xbf16>
    %30 = vector.extract_strided_slice %29 {offsets = [0, 0], sizes = [64, 256], strides = [1, 1]} : vector<96x256xbf16> to vector<64x256xbf16>
    %c0_7 = arith.constant 0 : index
    %c0_8 = arith.constant 0 : index
    %c0_9 = arith.constant 0 : index
    %31 = vector.load %arg4[%c0_7, %c0_8, %c0_9] : memref<5x256x256xbf16, #tpu.memory_space<vmem>>, vector<1x256x256xbf16>
    %32 = vector.shape_cast %31 : vector<1x256x256xbf16> to vector<256x256xbf16>
    %cst_10 = arith.constant dense<0.000000e+00> : vector<64x256xf32>
    %33 = tpu.matmul %30, %32, %cst_10 {dimension_numbers = #tpu.dot_dimension_numbers<[1], [0], [0], [1], [0, 0, 1, 1], [], []>} : vector<64x256xbf16>, vector<256x256xbf16>, vector<64x256xf32> -> vector<64x256xf32>
    %34 = vector.extract_strided_slice %29 {offsets = [8, 0], sizes = [64, 256], strides = [1, 1]} : vector<96x256xbf16> to vector<64x256xbf16>
    %c1 = arith.constant 1 : index
    %c0_11 = arith.constant 0 : index
    %c0_12 = arith.constant 0 : index
    %35 = vector.load %arg4[%c1, %c0_11, %c0_12] : memref<5x256x256xbf16, #tpu.memory_space<vmem>>, vector<1x256x256xbf16>
    %36 = vector.shape_cast %35 : vector<1x256x256xbf16> to vector<256x256xbf16>
    %cst_13 = arith.constant dense<0.000000e+00> : vector<64x256xf32>
    %37 = tpu.matmul %34, %36, %cst_13 {dimension_numbers = #tpu.dot_dimension_numbers<[1], [0], [0], [1], [0, 0, 1, 1], [], []>} : vector<64x256xbf16>, vector<256x256xbf16>, vector<64x256xf32> -> vector<64x256xf32>
    %38 = arith.addf %33, %37 : vector<64x256xf32>
    %39 = vector.extract_strided_slice %29 {offsets = [16, 0], sizes = [64, 256], strides = [1, 1]} : vector<96x256xbf16> to vector<64x256xbf16>
    %c2 = arith.constant 2 : index
    %c0_14 = arith.constant 0 : index
    %c0_15 = arith.constant 0 : index
    %40 = vector.load %arg4[%c2, %c0_14, %c0_15] : memref<5x256x256xbf16, #tpu.memory_space<vmem>>, vector<1x256x256xbf16>
    %41 = vector.shape_cast %40 : vector<1x256x256xbf16> to vector<256x256xbf16>
    %cst_16 = arith.constant dense<0.000000e+00> : vector<64x256xf32>
    %42 = tpu.matmul %39, %41, %cst_16 {dimension_numbers = #tpu.dot_dimension_numbers<[1], [0], [0], [1], [0, 0, 1, 1], [], []>} : vector<64x256xbf16>, vector<256x256xbf16>, vector<64x256xf32> -> vector<64x256xf32>
    %43 = arith.addf %38, %42 : vector<64x256xf32>
    %44 = vector.extract_strided_slice %29 {offsets = [24, 0], sizes = [64, 256], strides = [1, 1]} : vector<96x256xbf16> to vector<64x256xbf16>
    %c3 = arith.constant 3 : index
    %c0_17 = arith.constant 0 : index
    %c0_18 = arith.constant 0 : index
    %45 = vector.load %arg4[%c3, %c0_17, %c0_18] : memref<5x256x256xbf16, #tpu.memory_space<vmem>>, vector<1x256x256xbf16>
    %46 = vector.shape_cast %45 : vector<1x256x256xbf16> to vector<256x256xbf16>
    %cst_19 = arith.constant dense<0.000000e+00> : vector<64x256xf32>
    %47 = tpu.matmul %44, %46, %cst_19 {dimension_numbers = #tpu.dot_dimension_numbers<[1], [0], [0], [1], [0, 0, 1, 1], [], []>} : vector<64x256xbf16>, vector<256x256xbf16>, vector<64x256xf32> -> vector<64x256xf32>
    %48 = arith.addf %43, %47 : vector<64x256xf32>
    %49 = vector.extract_strided_slice %29 {offsets = [32, 0], sizes = [64, 256], strides = [1, 1]} : vector<96x256xbf16> to vector<64x256xbf16>
    %c4 = arith.constant 4 : index
    %c0_20 = arith.constant 0 : index
    %c0_21 = arith.constant 0 : index
    %50 = vector.load %arg4[%c4, %c0_20, %c0_21] : memref<5x256x256xbf16, #tpu.memory_space<vmem>>, vector<1x256x256xbf16>
    %51 = vector.shape_cast %50 : vector<1x256x256xbf16> to vector<256x256xbf16>
    %cst_22 = arith.constant dense<0.000000e+00> : vector<64x256xf32>
    %52 = tpu.matmul %49, %51, %cst_22 {dimension_numbers = #tpu.dot_dimension_numbers<[1], [0], [0], [1], [0, 0, 1, 1], [], []>} : vector<64x256xbf16>, vector<256x256xbf16>, vector<64x256xf32> -> vector<64x256xf32>
    %53 = arith.addf %48, %52 : vector<64x256xf32>
    %c0_23 = arith.constant 0 : index
    %c0_24 = arith.constant 0 : index
    %54 = vector.load %arg5[%c0_23, %c0_24] : memref<1x256xf32, #tpu.memory_space<vmem>>, vector<1x256xf32>
    %55 = vector.broadcast %54 : vector<1x256xf32> to vector<64x256xf32>
    %56 = arith.addf %53, %55 : vector<64x256xf32>
    %57 = vector.extract_strided_slice %56 {offsets = [0, 0], sizes = [64, 128], strides = [1, 1]} : vector<64x256xf32> to vector<64x128xf32>
    %58 = vector.extract_strided_slice %56 {offsets = [0, 128], sizes = [64, 128], strides = [1, 1]} : vector<64x256xf32> to vector<64x128xf32>
    %59 = arith.maximumf %57, %58 : vector<64x128xf32>
    %60 = vector.shape_cast %59 : vector<64x128xf32> to vector<4x2x8x128xf32>
    %61 = vector.extract_strided_slice %60 {offsets = [0, 0, 0, 0], sizes = [4, 1, 8, 128], strides = [1, 1, 1, 1]} : vector<4x2x8x128xf32> to vector<4x1x8x128xf32>
    %62 = vector.shape_cast %61 : vector<4x1x8x128xf32> to vector<4x8x128xf32>
    %63 = vector.extract_strided_slice %60 {offsets = [0, 1, 0, 0], sizes = [4, 1, 8, 128], strides = [1, 1, 1, 1]} : vector<4x2x8x128xf32> to vector<4x1x8x128xf32>
    %64 = vector.shape_cast %63 : vector<4x1x8x128xf32> to vector<4x8x128xf32>
    %65 = arith.maximumf %62, %64 : vector<4x8x128xf32>
    %66 = vector.shape_cast %65 : vector<4x8x128xf32> to vector<32x128xf32>
    %cst_25 = arith.constant 0.000000e+00 : f32
    %67 = vector.broadcast %cst_25 : f32 to vector<32x128xf32>
    %68 = arith.maximumf %66, %67 : vector<32x128xf32>
    %69 = arith.truncf %68 : vector<32x128xf32> to vector<32x128xbf16>
    %70 = vector.extract_strided_slice %69 {offsets = [0, 0], sizes = [8, 128], strides = [1, 1]} : vector<32x128xbf16> to vector<8x128xbf16>
    %c0_26 = arith.constant 0 : index
    %c0_27 = arith.constant 0 : index
    %c0_28 = arith.constant 0 : index
    %71 = vector.load %arg6[%c0_26, %c0_27, %c0_28] : memref<4x128x128xbf16, #tpu.memory_space<vmem>>, vector<1x128x128xbf16>
    %72 = vector.shape_cast %71 : vector<1x128x128xbf16> to vector<128x128xbf16>
    %cst_29 = arith.constant dense<0.000000e+00> : vector<8x128xf32>
    %73 = tpu.matmul %70, %72, %cst_29 {dimension_numbers = #tpu.dot_dimension_numbers<[1], [0], [0], [1], [0, 0, 1, 1], [], []>} : vector<8x128xbf16>, vector<128x128xbf16>, vector<8x128xf32> -> vector<8x128xf32>
    %74 = vector.extract_strided_slice %69 {offsets = [8, 0], sizes = [8, 128], strides = [1, 1]} : vector<32x128xbf16> to vector<8x128xbf16>
    %c1_30 = arith.constant 1 : index
    %c0_31 = arith.constant 0 : index
    %c0_32 = arith.constant 0 : index
    %75 = vector.load %arg6[%c1_30, %c0_31, %c0_32] : memref<4x128x128xbf16, #tpu.memory_space<vmem>>, vector<1x128x128xbf16>
    %76 = vector.shape_cast %75 : vector<1x128x128xbf16> to vector<128x128xbf16>
    %cst_33 = arith.constant dense<0.000000e+00> : vector<8x128xf32>
    %77 = tpu.matmul %74, %76, %cst_33 {dimension_numbers = #tpu.dot_dimension_numbers<[1], [0], [0], [1], [0, 0, 1, 1], [], []>} : vector<8x128xbf16>, vector<128x128xbf16>, vector<8x128xf32> -> vector<8x128xf32>
    %78 = arith.addf %73, %77 : vector<8x128xf32>
    %79 = vector.extract_strided_slice %69 {offsets = [16, 0], sizes = [8, 128], strides = [1, 1]} : vector<32x128xbf16> to vector<8x128xbf16>
    %c2_34 = arith.constant 2 : index
    %c0_35 = arith.constant 0 : index
    %c0_36 = arith.constant 0 : index
    %80 = vector.load %arg6[%c2_34, %c0_35, %c0_36] : memref<4x128x128xbf16, #tpu.memory_space<vmem>>, vector<1x128x128xbf16>
    %81 = vector.shape_cast %80 : vector<1x128x128xbf16> to vector<128x128xbf16>
    %cst_37 = arith.constant dense<0.000000e+00> : vector<8x128xf32>
    %82 = tpu.matmul %79, %81, %cst_37 {dimension_numbers = #tpu.dot_dimension_numbers<[1], [0], [0], [1], [0, 0, 1, 1], [], []>} : vector<8x128xbf16>, vector<128x128xbf16>, vector<8x128xf32> -> vector<8x128xf32>
    %83 = arith.addf %78, %82 : vector<8x128xf32>
    %84 = vector.extract_strided_slice %69 {offsets = [24, 0], sizes = [8, 128], strides = [1, 1]} : vector<32x128xbf16> to vector<8x128xbf16>
    %c3_38 = arith.constant 3 : index
    %c0_39 = arith.constant 0 : index
    %c0_40 = arith.constant 0 : index
    %85 = vector.load %arg6[%c3_38, %c0_39, %c0_40] : memref<4x128x128xbf16, #tpu.memory_space<vmem>>, vector<1x128x128xbf16>
    %86 = vector.shape_cast %85 : vector<1x128x128xbf16> to vector<128x128xbf16>
    %cst_41 = arith.constant dense<0.000000e+00> : vector<8x128xf32>
    %87 = tpu.matmul %84, %86, %cst_41 {dimension_numbers = #tpu.dot_dimension_numbers<[1], [0], [0], [1], [0, 0, 1, 1], [], []>} : vector<8x128xbf16>, vector<128x128xbf16>, vector<8x128xf32> -> vector<8x128xf32>
    %88 = arith.addf %83, %87 : vector<8x128xf32>
    %c0_42 = arith.constant 0 : index
    %c0_43 = arith.constant 0 : index
    %89 = vector.load %arg7[%c0_42, %c0_43] : memref<1x128xf32, #tpu.memory_space<vmem>>, vector<1x128xf32>
    %90 = vector.broadcast %89 : vector<1x128xf32> to vector<8x128xf32>
    %91 = arith.addf %88, %90 : vector<8x128xf32>
    %cst_44 = arith.constant 0.000000e+00 : f32
    %92 = vector.broadcast %cst_44 : f32 to vector<8x128xf32>
    %93 = arith.maximumf %91, %92 : vector<8x128xf32>
    %94 = arith.truncf %93 : vector<8x128xf32> to vector<8x128xbf16>
    %c0_45 = arith.constant 0 : index
    %c0_46 = arith.constant 0 : index
    %95 = vector.load %arg8[%c0_45, %c0_46] : memref<128x128xbf16, #tpu.memory_space<vmem>>, vector<128x128xbf16>
    %cst_47 = arith.constant dense<0.000000e+00> : vector<8x128xf32>
    %96 = tpu.matmul %94, %95, %cst_47 {dimension_numbers = #tpu.dot_dimension_numbers<[1], [0], [0], [1], [0, 0, 1, 1], [], []>} : vector<8x128xbf16>, vector<128x128xbf16>, vector<8x128xf32> -> vector<8x128xf32>
    %c0_48 = arith.constant 0 : index
    %c0_49 = arith.constant 0 : index
    %97 = vector.load %arg9[%c0_48, %c0_49] : memref<1x128xf32, #tpu.memory_space<vmem>>, vector<1x128xf32>
    %98 = vector.broadcast %97 : vector<1x128xf32> to vector<8x128xf32>
    %99 = arith.addf %96, %98 : vector<8x128xf32>
    %cst_50 = arith.constant dense<0xFF800000> : vector<8xf32>
    %100 = vector.multi_reduction <maximumf>, %99, %cst_50 [1] : vector<8x128xf32> to vector<8xf32>
    %101 = vector.shape_cast %100 : vector<8xf32> to vector<8x1xf32>
    %102 = vector.broadcast %101 : vector<8x1xf32> to vector<8x128xf32>
    %103 = arith.subf %99, %102 : vector<8x128xf32>
    %104 = math.exp %103 : vector<8x128xf32>
    %cst_51 = arith.constant dense<0.000000e+00> : vector<8xf32>
    %105 = vector.multi_reduction <add>, %104, %cst_51 [1] : vector<8x128xf32> to vector<8xf32>
    %106 = vector.shape_cast %105 : vector<8xf32> to vector<8x1xf32>
    %107 = math.log %106 : vector<8x1xf32>
    %108 = vector.broadcast %107 : vector<8x1xf32> to vector<8x128xf32>
    %109 = arith.subf %103, %108 : vector<8x128xf32>
    %c0_52 = arith.constant 0 : index
    %c0_53 = arith.constant 0 : index
    %110 = vector.load %arg10[%c0_52, %c0_53] : memref<8x128xf32, #tpu.memory_space<vmem>>, vector<8x128xf32>
    tpu.vector_store %arg10[%c0_52, %c0_53], %109 {strides = array<i32>} : memref<8x128xf32, #tpu.memory_space<vmem>>, vector<8x128xf32>,
    return
  }
  func.func @transform_0(%arg0: i32) -> (i32, i32, i32) {
    %c0_i32 = arith.constant 0 : i32
    %c0_i32_0 = arith.constant 0 : i32
    %c0_i32_1 = arith.constant 0 : i32
    return %c0_i32, %arg0, %c0_i32_0 : i32, i32, i32
  }
  func.func @transform_1(%arg0: i32) -> (i32, i32) {
    %c0_i32 = arith.constant 0 : i32
    %c0_i32_0 = arith.constant 0 : i32
    %c0_i32_1 = arith.constant 0 : i32
    return %c0_i32, %c0_i32_0 : i32, i32
  }
  func.func @transform_2(%arg0: i32) -> (i32, i32) {
    %c0_i32 = arith.constant 0 : i32
    %c0_i32_0 = arith.constant 0 : i32
    %c0_i32_1 = arith.constant 0 : i32
    return %c0_i32, %c0_i32_0 : i32, i32
  }
  func.func @transform_3(%arg0: i32) -> (i32, i32, i32) {
    %c0_i32 = arith.constant 0 : i32
    %c0_i32_0 = arith.constant 0 : i32
    %c0_i32_1 = arith.constant 0 : i32
    %c0_i32_2 = arith.constant 0 : i32
    return %c0_i32, %c0_i32_0, %c0_i32_1 : i32, i32, i32
  }
  func.func @transform_4(%arg0: i32) -> (i32, i32) {
    %c0_i32 = arith.constant 0 : i32
    %c0_i32_0 = arith.constant 0 : i32
    %c0_i32_1 = arith.constant 0 : i32
    return %c0_i32, %c0_i32_0 : i32, i32
  }
  func.func @transform_5(%arg0: i32) -> (i32, i32, i32) {
    %c0_i32 = arith.constant 0 : i32
    %c0_i32_0 = arith.constant 0 : i32
    %c0_i32_1 = arith.constant 0 : i32
    %c0_i32_2 = arith.constant 0 : i32
    return %c0_i32, %c0_i32_0, %c0_i32_1 : i32, i32, i32
  }
  func.func @transform_6(%arg0: i32) -> (i32, i32) {
    %c0_i32 = arith.constant 0 : i32
    %c0_i32_0 = arith.constant 0 : i32
    %c0_i32_1 = arith.constant 0 : i32
    return %c0_i32, %c0_i32_0 : i32, i32
  }
  func.func @transform_7(%arg0: i32) -> (i32, i32) {
    %c0_i32 = arith.constant 0 : i32
    %c0_i32_0 = arith.constant 0 : i32
    %c0_i32_1 = arith.constant 0 : i32
    return %c0_i32, %c0_i32_0 : i32, i32
  }
  func.func @transform_8(%arg0: i32) -> (i32, i32) {
    %c0_i32 = arith.constant 0 : i32
    %c0_i32_0 = arith.constant 0 : i32
    %c0_i32_1 = arith.constant 0 : i32
    return %c0_i32, %c0_i32_0 : i32, i32
  }
  func.func @transform_9(%arg0: i32) -> (i32, i32) {
    %c0_i32 = arith.constant 0 : i32
    %c0_i32_0 = arith.constant 0 : i32
    return %arg0, %c0_i32 : i32, i32
  }
}

</mosaic_0001>

<llo_original>
// kernel: forward.1
$region0: #{forward.1}
  #allocation0 [shape = 'u32[]', space=smem, size = 0x4, offset = 0x4, fixed_abs, tag = 'smem constant byte address 0x4 - core index']
  #allocation1 [shape = 'u32[144,128]{1,0:T(1,128)}', space=vmem, size = 0x12000, scoped, tag = 'internal scratch']
  %s0 = inlined_call_operand.vmem [shape: bf16[28,8,28], index: 0, kind: input, shape index: {}]
  %s1 = inlined_call_operand.hbm [shape: bf16[140,512], index: 1, kind: input, shape index: {}]
  %s2 = inlined_call_operand.vmem [shape: f32[1,512], index: 2, kind: input, shape index: {}]
  %s3 = inlined_call_operand.hbm [shape: bf16[5,256,256], index: 3, kind: input, shape index: {}]
  %s4 = inlined_call_operand.vmem [shape: f32[1,256], index: 4, kind: input, shape index: {}]
  %s5 = inlined_call_operand.hbm [shape: bf16[4,128,128], index: 5, kind: input, shape index: {}]
  %s6 = inlined_call_operand.vmem [shape: f32[1,128], index: 6, kind: input, shape index: {}]
  %s7 = inlined_call_operand.vmem [shape: bf16[128,128], index: 7, kind: input, shape index: {}]
  %s8 = inlined_call_operand.vmem [shape: f32[1,128], index: 8, kind: input, shape index: {}]
  %s9 = inlined_call_operand.vmem [shape: f32[8,128], index: 9, kind: output, shape index: {}]
  %s10 = sld [smem:[#allocation0]]
  $region58: #{forward.1} parent=0
    _
  %s12 = ssub.s32 1, %s10
  %s13 = scalar_select 0, %s12, %s10
  $region1: #{forward.1} parent=0
    #allocation2 [shape = 'u8[147456]{0}', space=vmem, size = 0x24000, scoped, tag = 'input window, operand 1, single buffered']
    #allocation3 [shape = 's32[1]{0}', space=sflag, size = 0x4, scoped, tag = 'scoped memory for forward.1']
    #allocation4 [shape = 'u8[655360]{0}', space=vmem, size = 0xa0000, scoped, tag = 'input window, operand 3, single buffered']
    #allocation5 [shape = 's32[1]{0}', space=sflag, size = 0x4, scoped, tag = 'scoped memory for forward.1']
    #allocation6 [shape = 'u8[131072]{0}', space=vmem, size = 0x20000, scoped, tag = 'input window, operand 5, single buffered']
    %14 = vsyncpa [#allocation3], 0
    %15 = vsyncpa [#allocation5], 0
    // Predicated region
    $region2: #{forward.1} parent=1 // pred_check
      _
    $region3: #{forward.1} parent=1 // pred_check_branch
      %17 = sbr.rel (0) target = $region5
    $region4: #{forward.1} parent=1 // pred_region
      _
    $region5: #{forward.1} parent=1 // pred_fallthru
      _
    // Predicated region
    $region6: #{forward.1} parent=1 // pred_check
      _
    $region7: #{forward.1} parent=1 // pred_check_branch
      %19 = sbr.rel (0) target = $region9
    $region8: #{forward.1} parent=1 // pred_region
      %s21 = ssub.s32 4608, 4608
      %22 = vsyncadd [#allocation3], %s21
      %s23 = sshll.u32 [#allocation2], 4
      %s24 = int_to_ptr.vmem [resolvable:$true] %s23
      %29 = dma.hbm_to_vmem [thread:$0]  %s1, 4608, %s24, [#allocation3], 256, 256, 16
    $region9: #{forward.1} parent=1 // pred_fallthru
      _
    // Predicated region
    $region10: #{forward.1} parent=1 // pred_check
      _
    $region11: #{forward.1} parent=1 // pred_check_branch
      %31 = sbr.rel (0) target = $region13
    $region12: #{forward.1} parent=1 // pred_region
      _
    $region13: #{forward.1} parent=1 // pred_fallthru
      _
    // Predicated region
    $region14: #{forward.1} parent=1 // pred_check
      _
    $region15: #{forward.1} parent=1 // pred_check_branch
      %33 = sbr.rel (0) target = $region17
    $region16: #{forward.1} parent=1 // pred_region
      %s35 = ssub.s32 20480, 20480
      %36 = vsyncadd [#allocation5], %s35
      %s37 = sshll.u32 [#allocation4], 4
      %s38 = int_to_ptr.vmem [resolvable:$true] %s37
      %43 = dma.hbm_to_vmem [thread:$0]  %s3, 20480, %s38, [#allocation5], 128, 128, 8
    $region17: #{forward.1} parent=1 // pred_fallthru
      _
    // Predicated region
    $region18: #{forward.1} parent=1 // pred_check
      _
    $region19: #{forward.1} parent=1 // pred_check_branch
      %45 = sbr.rel (0) target = $region21
    $region20: #{forward.1} parent=1 // pred_region
      _
    $region21: #{forward.1} parent=1 // pred_fallthru
      _
    // Predicated region
    $region22: #{forward.1} parent=1 // pred_check
      _
    $region23: #{forward.1} parent=1 // pred_check_branch
      %47 = sbr.rel (0) target = $region25
    $region24: #{forward.1} parent=1 // pred_region
      %s49 = ssub.s32 4096, 4096
      %50 = vsyncadd [#allocation5], %s49
      %s51 = sshll.u32 [#allocation6], 4
      %s52 = int_to_ptr.vmem [resolvable:$true] %s51
      %57 = dma.hbm_to_vmem [thread:$0]  %s5, 4096, %s52, [#allocation5], 64, 64, 4
    $region25: #{forward.1} parent=1 // pred_fallthru
      _
    // Predicated region
    $region26: #{forward.1} parent=1 // pred_check
      _
    $region27: #{forward.1} parent=1 // pred_check_branch
      %59 = sbr.rel (0) target = $region29
    $region28: #{forward.1} parent=1 // pred_region
      _
    $region29: #{forward.1} parent=1 // pred_fallthru
      _
    // Predicated region
    $region30: #{forward.1} parent=1 // pred_check
      _
    $region31: #{forward.1} parent=1 // pred_check_branch
      %61 = sbr.rel (0) target = $region33
    $region32: #{forward.1} parent=1 // pred_region
      _
    $region33: #{forward.1} parent=1 // pred_fallthru
      _
    // Predicated region
    $region34: #{forward.1} parent=1 // pred_check
      _
    $region35: #{forward.1} parent=1 // pred_check_branch
      %63 = sbr.rel (0) target = $region37
    $region36: #{forward.1} parent=1 // pred_region
      _
    $region37: #{forward.1} parent=1 // pred_fallthru
      _
    // Predicated region
    $region38: #{forward.1} parent=1 // pred_check
      _
    $region39: #{forward.1} parent=1 // pred_check_branch
      %65 = sbr.rel (0) target = $region41
    $region40: #{forward.1} parent=1 // pred_region
      %66 = dma.done [#allocation3], 4608
    $region41: #{forward.1} parent=1 // pred_fallthru
      _
    // Predicated region
    $region42: #{forward.1} parent=1 // pred_check
      _
    $region43: #{forward.1} parent=1 // pred_check_branch
      %68 = sbr.rel (0) target = $region45
    $region44: #{forward.1} parent=1 // pred_region
      %69 = dma.done [#allocation5], 20480
    $region45: #{forward.1} parent=1 // pred_fallthru
      _
    // Predicated region
    $region46: #{forward.1} parent=1 // pred_check
      _
    $region47: #{forward.1} parent=1 // pred_check_branch
      %71 = sbr.rel (0) target = $region49
    $region48: #{forward.1} parent=1 // pred_region
      %72 = dma.done [#allocation5], 4096
    $region49: #{forward.1} parent=1 // pred_fallthru
      _
    %v74 = vld [vmem:[%s0] sm:$0xf]
    %v75 = vld [vmem:[%s0 + $0x4] sm:$0xf]
    %v76 = vld [vmem:[%s0 + $0x8] sm:$0xf]
    %v77 = vld [vmem:[%s0 + $0xc] sm:$0xf]
    %v78 = vld [vmem:[%s0 + $0x10] sm:$0xf]
    %v79 = vld [vmem:[%s0 + $0x14] sm:$0xf]
    %v80 = vld [vmem:[%s0 + $0x18] sm:$0xf]
    %v81 = vld [vmem:[%s0 + $0x1c] sm:$0xf]
    %v82 = vld [vmem:[%s0 + $0x20] sm:$0xf]
    %v83 = vld [vmem:[%s0 + $0x24] sm:$0xf]
    %v84 = vld [vmem:[%s0 + $0x28] sm:$0xf]
    %v85 = vld [vmem:[%s0 + $0x2c] sm:$0xf]
    %v86 = vld [vmem:[%s0 + $0x30] sm:$0xf]
    %v87 = vld [vmem:[%s0 + $0x34] sm:$0xf]
    %v88 = vld [vmem:[%s0 + $0x38] sm:$0xf]
    %v89 = vld [vmem:[%s0 + $0x3c] sm:$0xf]
    %v90 = vld [vmem:[%s0 + $0x40] sm:$0xf]
    %v91 = vld [vmem:[%s0 + $0x44] sm:$0xf]
    %v92 = vld [vmem:[%s0 + $0x48] sm:$0xf]
    %v93 = vld [vmem:[%s0 + $0x4c] sm:$0xf]
    %v94 = vld [vmem:[%s0 + $0x50] sm:$0xf]
    %v95 = vld [vmem:[%s0 + $0x54] sm:$0xf]
    %v96 = vld [vmem:[%s0 + $0x58] sm:$0xf]
    %v97 = vld [vmem:[%s0 + $0x5c] sm:$0xf]
    %v98 = vld [vmem:[%s0 + $0x60] sm:$0xf]
    %v99 = vld [vmem:[%s0 + $0x64] sm:$0xf]
    %v100 = vld [vmem:[%s0 + $0x68] sm:$0xf]
    %v101 = vld [vmem:[%s0 + $0x6c] sm:$0xf]
    %v126 = vunpack.c.l.b16 %v74
    %v127 = vunpack.c.l.b16 %v75
    %v128 = vunpack.c.l.b16 %v76
    %v129 = vunpack.c.l.b16 %v77
    %v130 = vunpack.c.l.b16 %v78
    %v131 = vunpack.c.l.b16 %v79
    %v132 = vunpack.c.l.b16 %v80
    %v133 = vunpack.c.l.b16 %v81
    %v134 = vunpack.c.l.b16 %v82
    %v135 = vunpack.c.l.b16 %v83
    %v136 = vunpack.c.l.b16 %v84
    %v137 = vunpack.c.l.b16 %v85
    %v138 = vunpack.c.l.b16 %v86
    %v139 = vunpack.c.l.b16 %v87
    %v140 = vunpack.c.l.b16 %v88
    %v141 = vunpack.c.l.b16 %v89
    %v142 = vunpack.c.l.b16 %v90
    %v143 = vunpack.c.l.b16 %v91
    %v144 = vunpack.c.l.b16 %v92
    %v145 = vunpack.c.l.b16 %v93
    %v146 = vunpack.c.l.b16 %v94
    %v147 = vunpack.c.l.b16 %v95
    %v148 = vunpack.c.l.b16 %v96
    %v149 = vunpack.c.l.b16 %v97
    %v150 = vpack.c.b16 %v127, %v126
    %v151 = vpack.c.b16 %v129, %v128
    %v152 = vpack.c.b16 %v131, %v130
    %v153 = vpack.c.b16 %v133, %v132
    %v154 = vpack.c.b16 %v135, %v134
    %v155 = vpack.c.b16 %v137, %v136
    %v156 = vpack.c.b16 %v139, %v138
    %v157 = vpack.c.b16 %v141, %v140
    %v158 = vpack.c.b16 %v143, %v142
    %v159 = vpack.c.b16 %v145, %v144
    %v160 = vpack.c.b16 %v147, %v146
    %v161 = vpack.c.b16 %v149, %v148
    %v163 = vunpack.c.l.b16 %v98
    %v164 = vpack.c.b16 %v128, %v127
    %v165 = vpack.c.b16 %v130, %v129
    %v166 = vpack.c.b16 %v132, %v131
    %v167 = vpack.c.b16 %v134, %v133
    %v168 = vpack.c.b16 %v136, %v135
    %v169 = vpack.c.b16 %v138, %v137
    %v170 = vpack.c.b16 %v140, %v139
    %v171 = vpack.c.b16 %v142, %v141
    %v172 = vpack.c.b16 %v144, %v143
    %v173 = vpack.c.b16 %v146, %v145
    %v174 = vpack.c.b16 %v148, %v147
    %v175 = vpack.c.b16 %v163, %v149
    %176 = vrot.lane.b32.xlu0 %v164, 28
    %v177 = vpop.permute.xlu0 %176
    %178 = vrot.lane.b32.xlu0 %v165, 28
    %v179 = vpop.permute.xlu0 %178
    %180 = vrot.lane.b32.xlu0 %v166, 28
    %v181 = vpop.permute.xlu0 %180
    %182 = vrot.lane.b32.xlu0 %v167, 28
    %v183 = vpop.permute.xlu0 %182
    %184 = vrot.lane.b32.xlu0 %v168, 28
    %v185 = vpop.permute.xlu0 %184
    %186 = vrot.lane.b32.xlu0 %v169, 28
    %v187 = vpop.permute.xlu0 %186
    %188 = vrot.lane.b32.xlu0 %v170, 28
    %v189 = vpop.permute.xlu0 %188
    %190 = vrot.lane.b32.xlu0 %v171, 28
    %v191 = vpop.permute.xlu0 %190
    %192 = vrot.lane.b32.xlu0 %v172, 28
    %v193 = vpop.permute.xlu0 %192
    %194 = vrot.lane.b32.xlu0 %v173, 28
    %v195 = vpop.permute.xlu0 %194
    %196 = vrot.lane.b32.xlu0 %v174, 28
    %v197 = vpop.permute.xlu0 %196
    %198 = vrot.lane.b32.xlu0 %v175, 28
    %v199 = vpop.permute.xlu0 %198
    %v201 = vunpack.c.l.b16 %v99
    %v202 = vpack.c.b16 %v201, %v163
    %203 = vrot.lane.b32.xlu0 %v151, 56
    %v204 = vpop.permute.xlu0 %203
    %205 = vrot.lane.b32.xlu0 %v152, 56
    %v206 = vpop.permute.xlu0 %205
    %207 = vrot.lane.b32.xlu0 %v153, 56
    %v208 = vpop.permute.xlu0 %207
    %209 = vrot.lane.b32.xlu0 %v154, 56
    %v210 = vpop.permute.xlu0 %209
    %211 = vrot.lane.b32.xlu0 %v155, 56
    %v212 = vpop.permute.xlu0 %211
    %213 = vrot.lane.b32.xlu0 %v156, 56
    %v214 = vpop.permute.xlu0 %213
    %215 = vrot.lane.b32.xlu0 %v157, 56
    %v216 = vpop.permute.xlu0 %215
    %217 = vrot.lane.b32.xlu0 %v158, 56
    %v218 = vpop.permute.xlu0 %217
    %219 = vrot.lane.b32.xlu0 %v159, 56
    %v220 = vpop.permute.xlu0 %219
    %221 = vrot.lane.b32.xlu0 %v160, 56
    %v222 = vpop.permute.xlu0 %221
    %223 = vrot.lane.b32.xlu0 %v161, 56
    %v224 = vpop.permute.xlu0 %223
    %225 = vrot.lane.b32.xlu0 %v202, 56
    %v226 = vpop.permute.xlu0 %225
    %v228 = vunpack.c.l.b16 %v100
    %v229 = vpack.c.b16 %v228, %v201
    %230 = vrot.lane.b32.xlu0 %v165, 84
    %v231 = vpop.permute.xlu0 %230
    %232 = vrot.lane.b32.xlu0 %v166, 84
    %v233 = vpop.permute.xlu0 %232
    %234 = vrot.lane.b32.xlu0 %v167, 84
    %v235 = vpop.permute.xlu0 %234
    %236 = vrot.lane.b32.xlu0 %v168, 84
    %v237 = vpop.permute.xlu0 %236
    %238 = vrot.lane.b32.xlu0 %v169, 84
    %v239 = vpop.permute.xlu0 %238
    %240 = vrot.lane.b32.xlu0 %v170, 84
    %v241 = vpop.permute.xlu0 %240
    %242 = vrot.lane.b32.xlu0 %v171, 84
    %v243 = vpop.permute.xlu0 %242
    %244 = vrot.lane.b32.xlu0 %v172, 84
    %v245 = vpop.permute.xlu0 %244
    %246 = vrot.lane.b32.xlu0 %v173, 84
    %v247 = vpop.permute.xlu0 %246
    %248 = vrot.lane.b32.xlu0 %v174, 84
    %v249 = vpop.permute.xlu0 %248
    %250 = vrot.lane.b32.xlu0 %v175, 84
    %v251 = vpop.permute.xlu0 %250
    %252 = vrot.lane.b32.xlu0 %v229, 84
    %v253 = vpop.permute.xlu0 %252
    %v255 = vunpack.c.l.b16 %v101
    %v256 = vpack.c.b16 %v255, %v228
    %257 = vrot.lane.b32.xlu0 %v152, 112
    %v258 = vpop.permute.xlu0 %257
    %259 = vrot.lane.b32.xlu0 %v153, 112
    %v260 = vpop.permute.xlu0 %259
    %261 = vrot.lane.b32.xlu0 %v154, 112
    %v262 = vpop.permute.xlu0 %261
    %263 = vrot.lane.b32.xlu0 %v155, 112
    %v264 = vpop.permute.xlu0 %263
    %265 = vrot.lane.b32.xlu0 %v156, 112
    %v266 = vpop.permute.xlu0 %265
    %267 = vrot.lane.b32.xlu0 %v157, 112
    %v268 = vpop.permute.xlu0 %267
    %269 = vrot.lane.b32.xlu0 %v158, 112
    %v270 = vpop.permute.xlu0 %269
    %271 = vrot.lane.b32.xlu0 %v159, 112
    %v272 = vpop.permute.xlu0 %271
    %273 = vrot.lane.b32.xlu0 %v160, 112
    %v274 = vpop.permute.xlu0 %273
    %275 = vrot.lane.b32.xlu0 %v161, 112
    %v276 = vpop.permute.xlu0 %275
    %277 = vrot.lane.b32.xlu0 %v202, 112
    %v278 = vpop.permute.xlu0 %277
    %279 = vrot.lane.b32.xlu0 %v256, 112
    %v280 = vpop.permute.xlu0 %279
    %vm281 = vcmask 228352
    %v284 = vsel %vm281, %v150, %v177
    %v287 = vsel %vm281, %v151, %v179
    %v290 = vsel %vm281, %v152, %v181
    %v293 = vsel %vm281, %v153, %v183
    %v296 = vsel %vm281, %v154, %v185
    %v299 = vsel %vm281, %v155, %v187
    %v302 = vsel %vm281, %v156, %v189
    %v305 = vsel %vm281, %v157, %v191
    %v308 = vsel %vm281, %v158, %v193
    %v311 = vsel %vm281, %v159, %v195
    %v314 = vsel %vm281, %v160, %v197
    %v317 = vsel %vm281, %v161, %v199
    %vm318 = vcmask 457728
    %v320 = vsel %vm318, %v284, %v204
    %v322 = vsel %vm318, %v287, %v206
    %v324 = vsel %vm318, %v290, %v208
    %v326 = vsel %vm318, %v293, %v210
    %v328 = vsel %vm318, %v296, %v212
    %v330 = vsel %vm318, %v299, %v214
    %v332 = vsel %vm318, %v302, %v216
    %v334 = vsel %vm318, %v305, %v218
    %v336 = vsel %vm318, %v308, %v220
    %v338 = vsel %vm318, %v311, %v222
    %v340 = vsel %vm318, %v314, %v224
    %v342 = vsel %vm318, %v317, %v226
    %vm343 = vcmask 687104
    %v345 = vsel %vm343, %v320, %v231
    %v347 = vsel %vm343, %v322, %v233
    %v349 = vsel %vm343, %v324, %v235
    %v351 = vsel %vm343, %v326, %v237
    %v353 = vsel %vm343, %v328, %v239
    %v355 = vsel %vm343, %v330, %v241
    %v357 = vsel %vm343, %v332, %v243
    %v359 = vsel %vm343, %v334, %v245
    %v361 = vsel %vm343, %v336, %v247
    %v363 = vsel %vm343, %v338, %v249
    %v365 = vsel %vm343, %v340, %v251
    %v367 = vsel %vm343, %v342, %v253
    %vm368 = vcmask 916480
    %v370 = vsel %vm368, %v345, %v258
    %v373 = vsel %vm368, %v347, %v260
    %v376 = vsel %vm368, %v349, %v262
    %v379 = vsel %vm368, %v351, %v264
    %v382 = vsel %vm368, %v353, %v266
    %v385 = vsel %vm368, %v355, %v268
    %v388 = vsel %vm368, %v357, %v270
    %v391 = vsel %vm368, %v359, %v272
    %v394 = vsel %vm368, %v361, %v274
    %v397 = vsel %vm368, %v363, %v276
    %v400 = vsel %vm368, %v365, %v278
    %v403 = vsel %vm368, %v367, %v280
    %v405 = vld [vmem:[#allocation2] sm:$0xff]
    %v406 = vld [vmem:[#allocation2 + $0x8] sm:$0xff]
    %v407 = vld [vmem:[#allocation2 + $0x10] sm:$0xff]
    %v408 = vld [vmem:[#allocation2 + $0x18] sm:$0xff]
    %v409 = vld [vmem:[#allocation2 + $0x20] sm:$0xff]
    %v410 = vld [vmem:[#allocation2 + $0x28] sm:$0xff]
    %v411 = vld [vmem:[#allocation2 + $0x30] sm:$0xff]
    %v412 = vld [vmem:[#allocation2 + $0x38] sm:$0xff]
    %v413 = vld [vmem:[#allocation2 + $0x40] sm:$0xff]
    %v414 = vld [vmem:[#allocation2 + $0x48] sm:$0xff]
    %v415 = vld [vmem:[#allocation2 + $0x50] sm:$0xff]
    %v416 = vld [vmem:[#allocation2 + $0x58] sm:$0xff]
    %v417 = vld [vmem:[#allocation2 + $0x60] sm:$0xff]
    %v418 = vld [vmem:[#allocation2 + $0x68] sm:$0xff]
    %v419 = vld [vmem:[#allocation2 + $0x70] sm:$0xff]
    %v420 = vld [vmem:[#allocation2 + $0x78] sm:$0xff]
    %v421 = vld [vmem:[#allocation2 + $0x80] sm:$0xff]
    %v422 = vld [vmem:[#allocation2 + $0x88] sm:$0xff]
    %v423 = vld [vmem:[#allocation2 + $0x90] sm:$0xff]
    %v424 = vld [vmem:[#allocation2 + $0x98] sm:$0xff]
    %v425 = vld [vmem:[#allocation2 + $0xa0] sm:$0xff]
    %v426 = vld [vmem:[#allocation2 + $0xa8] sm:$0xff]
    %v427 = vld [vmem:[#allocation2 + $0xb0] sm:$0xff]
    %v428 = vld [vmem:[#allocation2 + $0xb8] sm:$0xff]
    %v429 = vld [vmem:[#allocation2 + $0xc0] sm:$0xff]
    %v430 = vld [vmem:[#allocation2 + $0xc8] sm:$0xff]
    %v431 = vld [vmem:[#allocation2 + $0xd0] sm:$0xff]
    %v432 = vld [vmem:[#allocation2 + $0xd8] sm:$0xff]
    %v433 = vld [vmem:[#allocation2 + $0xe0] sm:$0xff]
    %v434 = vld [vmem:[#allocation2 + $0xe8] sm:$0xff]
    %v435 = vld [vmem:[#allocation2 + $0xf0] sm:$0xff]
    %v436 = vld [vmem:[#allocation2 + $0xf8] sm:$0xff]
    %v437 = vld [vmem:[#allocation2 + $0x100] sm:$0xff]
    %v438 = vld [vmem:[#allocation2 + $0x108] sm:$0xff]
    %v439 = vld [vmem:[#allocation2 + $0x110] sm:$0x33]
    %v440 = vld [vmem:[#allocation2 + $0x118] sm:$0x33]
    %v441 = vld [vmem:[%s2] sm:$0xf]
    %v443 = vlaneseq
    %v444 = vshrl.u32 %v443, 7
    %v445 = vsub.s32 0, %v444
    %v446 = vrot.slane %v441, %v445
    %v447 = vlaneseq
    %v448 = vshrl.u32 %v447, 7
    %v449 = vsub.s32 1, %v448
    %v450 = vrot.slane %v441, %v449
    %v451 = vlaneseq
    %v452 = vshrl.u32 %v451, 7
    %v453 = vsub.s32 2, %v452
    %v454 = vrot.slane %v441, %v453
    %v455 = vlaneseq
    %v456 = vshrl.u32 %v455, 7
    %v457 = vsub.s32 3, %v456
    %v458 = vrot.slane %v441, %v457
    %v499 = vunpack.c.l.b16 %v405
    %v500 = vunpack.c.h.b16 %v405
    %v501 = vunpack.c.l.b16 %v406
    %v502 = vunpack.c.h.b16 %v406
    %v503 = vunpack.c.l.b16 %v407
    %v504 = vunpack.c.h.b16 %v407
    %v505 = vunpack.c.l.b16 %v408
    %v506 = vunpack.c.h.b16 %v408
    %v507 = vunpack.c.l.b16 %v409
    %v508 = vunpack.c.h.b16 %v409
    %v509 = vunpack.c.l.b16 %v410
    %v510 = vunpack.c.h.b16 %v410
    %v511 = vunpack.c.l.b16 %v411
    %v512 = vunpack.c.h.b16 %v411
    %v513 = vunpack.c.l.b16 %v412
    %v514 = vunpack.c.h.b16 %v412
    %v515 = vunpack.c.l.b16 %v413
    %v516 = vunpack.c.h.b16 %v413
    %v517 = vunpack.c.l.b16 %v414
    %v518 = vunpack.c.h.b16 %v414
    %v519 = vunpack.c.l.b16 %v415
    %v520 = vunpack.c.h.b16 %v415
    %v521 = vunpack.c.l.b16 %v416
    %v522 = vunpack.c.h.b16 %v416
    %v523 = vunpack.c.l.b16 %v417
    %v524 = vunpack.c.h.b16 %v417
    %v525 = vunpack.c.l.b16 %v418
    %v526 = vunpack.c.h.b16 %v418
    %v527 = vunpack.c.l.b16 %v419
    %v528 = vunpack.c.h.b16 %v419
    %v529 = vunpack.c.l.b16 %v420
    %v530 = vunpack.c.h.b16 %v420
    %v531 = vunpack.c.l.b16 %v421
    %v532 = vunpack.c.h.b16 %v421
    %v533 = vunpack.c.l.b16 %v422
    %v534 = vunpack.c.h.b16 %v422
    %v535 = vunpack.c.l.b16 %v423
    %v536 = vunpack.c.h.b16 %v423
    %v537 = vunpack.c.l.b16 %v424
    %v538 = vunpack.c.h.b16 %v424
    %v539 = vunpack.c.l.b16 %v425
    %v540 = vunpack.c.h.b16 %v425
    %v541 = vunpack.c.l.b16 %v426
    %v542 = vunpack.c.h.b16 %v426
    %v543 = vunpack.c.l.b16 %v427
    %v544 = vunpack.c.h.b16 %v427
    %v545 = vunpack.c.l.b16 %v428
    %v546 = vunpack.c.h.b16 %v428
    %v547 = vunpack.c.l.b16 %v429
    %v548 = vunpack.c.h.b16 %v429
    %v549 = vunpack.c.l.b16 %v430
    %v550 = vunpack.c.h.b16 %v430
    %v551 = vunpack.c.l.b16 %v431
    %v552 = vunpack.c.h.b16 %v431
    %v553 = vunpack.c.l.b16 %v432
    %v554 = vunpack.c.h.b16 %v432
    %v555 = vunpack.c.l.b16 %v433
    %v556 = vunpack.c.h.b16 %v433
    %v557 = vunpack.c.l.b16 %v434
    %v558 = vunpack.c.h.b16 %v434
    %v559 = vunpack.c.l.b16 %v435
    %v560 = vunpack.c.h.b16 %v435
    %v561 = vunpack.c.l.b16 %v436
    %v562 = vunpack.c.h.b16 %v436
    %v563 = vunpack.c.l.b16 %v437
    %v564 = vunpack.c.h.b16 %v437
    %v565 = vunpack.c.l.b16 %v438
    %v566 = vunpack.c.h.b16 %v438
    %v567 = vunpack.c.l.b16 %v439
    %v568 = vunpack.c.h.b16 %v439
    %v569 = vunpack.c.l.b16 %v440
    %v570 = vunpack.c.h.b16 %v440
    %v571 = vpack.c.b16 %v503, %v499
    %v572 = vpack.c.b16 %v504, %v500
    %v573 = vpack.c.b16 %v505, %v501
    %v574 = vpack.c.b16 %v506, %v502
    %v575 = vpack.c.b16 %v511, %v507
    %v576 = vpack.c.b16 %v512, %v508
    %v577 = vpack.c.b16 %v513, %v509
    %v578 = vpack.c.b16 %v514, %v510
    %v579 = vpack.c.b16 %v519, %v515
    %v580 = vpack.c.b16 %v520, %v516
    %v581 = vpack.c.b16 %v521, %v517
    %v582 = vpack.c.b16 %v522, %v518
    %v583 = vpack.c.b16 %v527, %v523
    %v584 = vpack.c.b16 %v528, %v524
    %v585 = vpack.c.b16 %v529, %v525
    %v586 = vpack.c.b16 %v530, %v526
    %v587 = vpack.c.b16 %v535, %v531
    %v588 = vpack.c.b16 %v536, %v532
    %v589 = vpack.c.b16 %v537, %v533
    %v590 = vpack.c.b16 %v538, %v534
    %v591 = vpack.c.b16 %v543, %v539
    %v592 = vpack.c.b16 %v544, %v540
    %v593 = vpack.c.b16 %v545, %v541
    %v594 = vpack.c.b16 %v546, %v542
    %v595 = vpack.c.b16 %v551, %v547
    %v596 = vpack.c.b16 %v552, %v548
    %v597 = vpack.c.b16 %v553, %v549
    %v598 = vpack.c.b16 %v554, %v550
    %v599 = vpack.c.b16 %v559, %v555
    %v600 = vpack.c.b16 %v560, %v556
    %v601 = vpack.c.b16 %v561, %v557
    %v602 = vpack.c.b16 %v562, %v558
    %v603 = vpack.c.b16 %v567, %v563
    %v604 = vpack.c.b16 %v568, %v564
    %v605 = vpack.c.b16 %v569, %v565
    %v606 = vpack.c.b16 %v570, %v566
    %vm639 = vcmask 97280
    %v640 = vsel %vm639, %v258, 0
    %v642 = vsel %vm639, %v260, 0
    %v644 = vsel %vm639, %v262, 0
    %v646 = vsel %vm639, %v264, 0
    %v648 = vsel %vm639, %v266, 0
    %v650 = vsel %vm639, %v268, 0
    %v652 = vsel %vm639, %v270, 0
    %v654 = vsel %vm639, %v272, 0
    %v656 = vsel %vm639, %v274, 0
    %v658 = vsel %vm639, %v276, 0
    %v660 = vsel %vm639, %v278, 0
    %v662 = vsel %vm639, %v280, 0
    %vm664 = vcmask 1045504
    %v666 = vsel %vm664, %v603, 0
    %v669 = vsel %vm664, %v604, 0
    %v672 = vsel %vm664, %v605, 0
    %v675 = vsel %vm664, %v606, 0
    %677 = vmatprep.subr.bf16.mxu0 %v572
    %678 = vmatpush1.bf16.msra.mxu0 %v571
    %679 = vmatprep.subr.bf16.mxu0 %v576
    %680 = vmatpush1.bf16.msra.mxu0 %v575
    %681 = vmatprep.subr.bf16.mxu0 %v580
    %682 = vmatpush1.bf16.msra.mxu0 %v579
    %683 = vmatprep.subr.bf16.mxu0 %v584
    %684 = vmatpush1.bf16.msra.mxu0 %v583
    %685 = vmatprep.subr.bf16.mxu0 %v588
    %686 = vmatpush1.bf16.msra.mxu0 %v587
    %687 = vmatprep.subr.bf16.mxu0 %v592
    %688 = vmatpush1.bf16.msra.mxu0 %v591
    %689 = vmatprep.subr.bf16.mxu0 %v596
    %690 = vmatpush1.bf16.msra.mxu0 %v595
    %691 = vmatprep.subr.bf16.mxu0 %v600
    %692 = vmatpush1.bf16.msra.mxu0 %v599
    %693 = vmatprep.subr.bf16.mxu0 %v669
    %694 = vmatpush1.bf16.msra.mxu0 %v666
    %695 = vmatprep.subr.bf16.mxu0 0
    %696 = vmatpush1.bf16.msra.mxu0 0
    %697 = vmatprep.subr.bf16.mxu0 0
    %698 = vmatpush1.bf16.msra.mxu0 0
    %699 = vmatprep.subr.bf16.mxu0 0
    %700 = vmatpush1.bf16.msra.mxu0 0
    %701 = vmatprep.subr.bf16.mxu0 0
    %702 = vmatpush1.bf16.msra.mxu0 0
    %703 = vmatprep.subr.bf16.mxu0 0
    %704 = vmatpush1.bf16.msra.mxu0 0
    %705 = vmatprep.subr.bf16.mxu0 0
    %706 = vmatpush1.bf16.msra.mxu0 0
    %707 = vmatprep.subr.bf16.mxu0 0
    %708 = vmatpush1.bf16.msra.mxu0 0
    %709 = vmatprep.mubr.bf16.mxu0 %v640
    %710 = vmatmul.mubr.bf16.gmra.mrb[0].mxu0 %v370
    %v711 = vpop.f32.mrb[0].mxu0
    %v712 = vadd.f32 %v446, %v711
    %v713 = vpop.f32.mrb[0].mxu0
    %v714 = vadd.f32 %v450, %v713
    %v715 = vpop.f32.mrb[0].mxu0
    %v716 = vadd.f32 %v446, %v715
    %v717 = vpop.f32.mrb[0].mxu0
    %v718 = vadd.f32 %v450, %v717
    %719 = vmatprep.mubr.bf16.mxu0 %v642
    %720 = vmatmul.mubr.bf16.gmra.mrb[0].mxu0 %v373
    %v721 = vpop.f32.mrb[0].mxu0
    %v722 = vadd.f32 %v446, %v721
    %v723 = vpop.f32.mrb[0].mxu0
    %v724 = vadd.f32 %v450, %v723
    %v725 = vpop.f32.mrb[0].mxu0
    %v726 = vadd.f32 %v446, %v725
    %v727 = vpop.f32.mrb[0].mxu0
    %v728 = vadd.f32 %v450, %v727
    %729 = vmatprep.mubr.bf16.mxu0 %v644
    %730 = vmatmul.mubr.bf16.gmra.mrb[0].mxu0 %v376
    %v731 = vpop.f32.mrb[0].mxu0
    %v732 = vadd.f32 %v446, %v731
    %v733 = vpop.f32.mrb[0].mxu0
    %v734 = vadd.f32 %v450, %v733
    %v735 = vpop.f32.mrb[0].mxu0
    %v736 = vadd.f32 %v446, %v735
    %v737 = vpop.f32.mrb[0].mxu0
    %v738 = vadd.f32 %v450, %v737
    %739 = vmatprep.mubr.bf16.mxu0 %v646
    %740 = vmatmul.mubr.bf16.gmra.mrb[0].mxu0 %v379
    %v741 = vpop.f32.mrb[0].mxu0
    %v742 = vadd.f32 %v446, %v741
    %v743 = vpop.f32.mrb[0].mxu0
    %v744 = vadd.f32 %v450, %v743
    %v745 = vpop.f32.mrb[0].mxu0
    %v746 = vadd.f32 %v446, %v745
    %v747 = vpop.f32.mrb[0].mxu0
    %v748 = vadd.f32 %v450, %v747
    %749 = vmatprep.mubr.bf16.mxu0 %v648
    %750 = vmatmul.mubr.bf16.gmra.mrb[0].mxu0 %v382
    %v751 = vpop.f32.mrb[0].mxu0
    %v752 = vadd.f32 %v446, %v751
    %v753 = vpop.f32.mrb[0].mxu0
    %v754 = vadd.f32 %v450, %v753
    %v755 = vpop.f32.mrb[0].mxu0
    %v756 = vadd.f32 %v446, %v755
    %v757 = vpop.f32.mrb[0].mxu0
    %v758 = vadd.f32 %v450, %v757
    %759 = vmatprep.mubr.bf16.mxu0 %v650
    %760 = vmatmul.mubr.bf16.gmra.mrb[0].mxu0 %v385
    %v761 = vpop.f32.mrb[0].mxu0
    %v762 = vadd.f32 %v446, %v761
    %v763 = vpop.f32.mrb[0].mxu0
    %v764 = vadd.f32 %v450, %v763
    %v765 = vpop.f32.mrb[0].mxu0
    %v766 = vadd.f32 %v446, %v765
    %v767 = vpop.f32.mrb[0].mxu0
    %v768 = vadd.f32 %v450, %v767
    %769 = vmatprep.mubr.bf16.mxu0 %v652
    %770 = vmatmul.mubr.bf16.gmra.mrb[0].mxu0 %v388
    %v771 = vpop.f32.mrb[0].mxu0
    %v772 = vadd.f32 %v446, %v771
    %v773 = vpop.f32.mrb[0].mxu0
    %v774 = vadd.f32 %v450, %v773
    %v775 = vpop.f32.mrb[0].mxu0
    %v776 = vadd.f32 %v446, %v775
    %v777 = vpop.f32.mrb[0].mxu0
    %v778 = vadd.f32 %v450, %v777
    %779 = vmatprep.mubr.bf16.mxu0 %v654
    %780 = vmatmul.mubr.bf16.gmra.mrb[0].mxu0 %v391
    %v781 = vpop.f32.mrb[0].mxu0
    %v782 = vadd.f32 %v446, %v781
    %v783 = vpop.f32.mrb[0].mxu0
    %v784 = vadd.f32 %v450, %v783
    %v785 = vpop.f32.mrb[0].mxu0
    %v786 = vadd.f32 %v446, %v785
    %v787 = vpop.f32.mrb[0].mxu0
    %v788 = vadd.f32 %v450, %v787
    %789 = vmatprep.mubr.bf16.mxu0 %v656
    %790 = vmatmul.mubr.bf16.gmra.mrb[0].mxu0 %v394
    %v791 = vpop.f32.mrb[0].mxu0
    %v792 = vadd.f32 %v446, %v791
    %v793 = vpop.f32.mrb[0].mxu0
    %v794 = vadd.f32 %v450, %v793
    %v795 = vpop.f32.mrb[0].mxu0
    %v796 = vadd.f32 %v446, %v795
    %v797 = vpop.f32.mrb[0].mxu0
    %v798 = vadd.f32 %v450, %v797
    %799 = vmatprep.mubr.bf16.mxu0 %v658
    %800 = vmatmul.mubr.bf16.gmra.mrb[0].mxu0 %v397
    %v801 = vpop.f32.mrb[0].mxu0
    %v802 = vadd.f32 %v446, %v801
    %v803 = vpop.f32.mrb[0].mxu0
    %v804 = vadd.f32 %v450, %v803
    %v805 = vpop.f32.mrb[0].mxu0
    %v806 = vadd.f32 %v446, %v805
    %v807 = vpop.f32.mrb[0].mxu0
    %v808 = vadd.f32 %v450, %v807
    %809 = vmatprep.mubr.bf16.mxu0 %v660
    %810 = vmatmul.mubr.bf16.gmra.mrb[0].mxu0 %v400
    %v811 = vpop.f32.mrb[0].mxu0
    %v812 = vadd.f32 %v446, %v811
    %v813 = vpop.f32.mrb[0].mxu0
    %v814 = vadd.f32 %v450, %v813
    %v815 = vpop.f32.mrb[0].mxu0
    %v816 = vadd.f32 %v446, %v815
    %v817 = vpop.f32.mrb[0].mxu0
    %v818 = vadd.f32 %v450, %v817
    %819 = vmatprep.mubr.bf16.mxu0 %v662
    %820 = vmatmul.mubr.bf16.gmra.mrb[0].mxu0 %v403
    %v821 = vpop.f32.mrb[0].mxu0
    %v822 = vadd.f32 %v446, %v821
    %v823 = vpop.f32.mrb[0].mxu0
    %v824 = vadd.f32 %v450, %v823
    %v825 = vpop.f32.mrb[0].mxu0
    %v826 = vadd.f32 %v446, %v825
    %v827 = vpop.f32.mrb[0].mxu0
    %v828 = vadd.f32 %v450, %v827
    %829 = vdwg.mxu0
    %830 = vmatprep.subr.bf16.mxu0 %v574
    %831 = vmatpush1.bf16.msra.mxu0 %v573
    %832 = vmatprep.subr.bf16.mxu0 %v578
    %833 = vmatpush1.bf16.msra.mxu0 %v577
    %834 = vmatprep.subr.bf16.mxu0 %v582
    %835 = vmatpush1.bf16.msra.mxu0 %v581
    %836 = vmatprep.subr.bf16.mxu0 %v586
    %837 = vmatpush1.bf16.msra.mxu0 %v585
    %838 = vmatprep.subr.bf16.mxu0 %v590
    %839 = vmatpush1.bf16.msra.mxu0 %v589
    %840 = vmatprep.subr.bf16.mxu0 %v594
    %841 = vmatpush1.bf16.msra.mxu0 %v593
    %842 = vmatprep.subr.bf16.mxu0 %v598
    %843 = vmatpush1.bf16.msra.mxu0 %v597
    %844 = vmatprep.subr.bf16.mxu0 %v602
    %845 = vmatpush1.bf16.msra.mxu0 %v601
    %846 = vmatprep.subr.bf16.mxu0 %v675
    %847 = vmatpush1.bf16.msra.mxu0 %v672
    %848 = vmatprep.subr.bf16.mxu0 0
    %849 = vmatpush1.bf16.msra.mxu0 0
    %850 = vmatprep.subr.bf16.mxu0 0
    %851 = vmatpush1.bf16.msra.mxu0 0
    %852 = vmatprep.subr.bf16.mxu0 0
    %853 = vmatpush1.bf16.msra.mxu0 0
    %854 = vmatprep.subr.bf16.mxu0 0
    %855 = vmatpush1.bf16.msra.mxu0 0
    %856 = vmatprep.subr.bf16.mxu0 0
    %857 = vmatpush1.bf16.msra.mxu0 0
    %858 = vmatprep.subr.bf16.mxu0 0
    %859 = vmatpush1.bf16.msra.mxu0 0
    %860 = vmatprep.subr.bf16.mxu0 0
    %861 = vmatpush1.bf16.msra.mxu0 0
    %862 = vmatprep.mubr.bf16.mxu0 %v640
    %863 = vmatmul.mubr.bf16.gmra.mrb[0].mxu0 %v370
    %v864 = vpop.f32.mrb[0].mxu0
    %v865 = vadd.f32 %v454, %v864
    %v866 = vpop.f32.mrb[0].mxu0
    %v867 = vadd.f32 %v458, %v866
    %v868 = vpop.f32.mrb[0].mxu0
    %v869 = vadd.f32 %v454, %v868
    %v870 = vpop.f32.mrb[0].mxu0
    %v871 = vadd.f32 %v458, %v870
    %872 = vmatprep.mubr.bf16.mxu0 %v642
    %873 = vmatmul.mubr.bf16.gmra.mrb[0].mxu0 %v373
    %v874 = vpop.f32.mrb[0].mxu0
    %v875 = vadd.f32 %v454, %v874
    %v876 = vpop.f32.mrb[0].mxu0
    %v877 = vadd.f32 %v458, %v876
    %v878 = vpop.f32.mrb[0].mxu0
    %v879 = vadd.f32 %v454, %v878
    %v880 = vpop.f32.mrb[0].mxu0
    %v881 = vadd.f32 %v458, %v880
    %882 = vmatprep.mubr.bf16.mxu0 %v644
    %883 = vmatmul.mubr.bf16.gmra.mrb[0].mxu0 %v376
    %v884 = vpop.f32.mrb[0].mxu0
    %v885 = vadd.f32 %v454, %v884
    %v886 = vpop.f32.mrb[0].mxu0
    %v887 = vadd.f32 %v458, %v886
    %v888 = vpop.f32.mrb[0].mxu0
    %v889 = vadd.f32 %v454, %v888
    %v890 = vpop.f32.mrb[0].mxu0
    %v891 = vadd.f32 %v458, %v890
    %892 = vmatprep.mubr.bf16.mxu0 %v646
    %893 = vmatmul.mubr.bf16.gmra.mrb[0].mxu0 %v379
    %v894 = vpop.f32.mrb[0].mxu0
    %v895 = vadd.f32 %v454, %v894
    %v896 = vpop.f32.mrb[0].mxu0
    %v897 = vadd.f32 %v458, %v896
    %v898 = vpop.f32.mrb[0].mxu0
    %v899 = vadd.f32 %v454, %v898
    %v900 = vpop.f32.mrb[0].mxu0
    %v901 = vadd.f32 %v458, %v900
    %902 = vmatprep.mubr.bf16.mxu0 %v648
    %903 = vmatmul.mubr.bf16.gmra.mrb[0].mxu0 %v382
    %v904 = vpop.f32.mrb[0].mxu0
    %v905 = vadd.f32 %v454, %v904
    %v906 = vpop.f32.mrb[0].mxu0
    %v907 = vadd.f32 %v458, %v906
    %v908 = vpop.f32.mrb[0].mxu0
    %v909 = vadd.f32 %v454, %v908
    %v910 = vpop.f32.mrb[0].mxu0
    %v911 = vadd.f32 %v458, %v910
    %912 = vmatprep.mubr.bf16.mxu0 %v650
    %913 = vmatmul.mubr.bf16.gmra.mrb[0].mxu0 %v385
    %v914 = vpop.f32.mrb[0].mxu0
    %v915 = vadd.f32 %v454, %v914
    %v916 = vpop.f32.mrb[0].mxu0
    %v917 = vadd.f32 %v458, %v916
    %v918 = vpop.f32.mrb[0].mxu0
    %v919 = vadd.f32 %v454, %v918
    %v920 = vpop.f32.mrb[0].mxu0
    %v921 = vadd.f32 %v458, %v920
    %922 = vmatprep.mubr.bf16.mxu0 %v652
    %923 = vmatmul.mubr.bf16.gmra.mrb[0].mxu0 %v388
    %v924 = vpop.f32.mrb[0].mxu0
    %v925 = vadd.f32 %v454, %v924
    %v926 = vpop.f32.mrb[0].mxu0
    %v927 = vadd.f32 %v458, %v926
    %v928 = vpop.f32.mrb[0].mxu0
    %v929 = vadd.f32 %v454, %v928
    %v930 = vpop.f32.mrb[0].mxu0
    %v931 = vadd.f32 %v458, %v930
    %932 = vmatprep.mubr.bf16.mxu0 %v654
    %933 = vmatmul.mubr.bf16.gmra.mrb[0].mxu0 %v391
    %v934 = vpop.f32.mrb[0].mxu0
    %v935 = vadd.f32 %v454, %v934
    %v936 = vpop.f32.mrb[0].mxu0
    %v937 = vadd.f32 %v458, %v936
    %v938 = vpop.f32.mrb[0].mxu0
    %v939 = vadd.f32 %v454, %v938
    %v940 = vpop.f32.mrb[0].mxu0
    %v941 = vadd.f32 %v458, %v940
    %942 = vmatprep.mubr.bf16.mxu0 %v656
    %943 = vmatmul.mubr.bf16.gmra.mrb[0].mxu0 %v394
    %v944 = vpop.f32.mrb[0].mxu0
    %v945 = vadd.f32 %v454, %v944
    %v946 = vpop.f32.mrb[0].mxu0
    %v947 = vadd.f32 %v458, %v946
    %v948 = vpop.f32.mrb[0].mxu0
    %v949 = vadd.f32 %v454, %v948
    %v950 = vpop.f32.mrb[0].mxu0
    %v951 = vadd.f32 %v458, %v950
    %952 = vmatprep.mubr.bf16.mxu0 %v658
    %953 = vmatmul.mubr.bf16.gmra.mrb[0].mxu0 %v397
    %v954 = vpop.f32.mrb[0].mxu0
    %v955 = vadd.f32 %v454, %v954
    %v956 = vpop.f32.mrb[0].mxu0
    %v957 = vadd.f32 %v458, %v956
    %v958 = vpop.f32.mrb[0].mxu0
    %v959 = vadd.f32 %v454, %v958
    %v960 = vpop.f32.mrb[0].mxu0
    %v961 = vadd.f32 %v458, %v960
    %962 = vmatprep.mubr.bf16.mxu0 %v660
    %963 = vmatmul.mubr.bf16.gmra.mrb[0].mxu0 %v400
    %v964 = vpop.f32.mrb[0].mxu0
    %v965 = vadd.f32 %v454, %v964
    %v966 = vpop.f32.mrb[0].mxu0
    %v967 = vadd.f32 %v458, %v966
    %v968 = vpop.f32.mrb[0].mxu0
    %v969 = vadd.f32 %v454, %v968
    %v970 = vpop.f32.mrb[0].mxu0
    %v971 = vadd.f32 %v458, %v970
    %972 = vmatprep.mubr.bf16.mxu0 %v662
    %973 = vmatmul.mubr.bf16.gmra.mrb[0].mxu0 %v403
    %v974 = vpop.f32.mrb[0].mxu0
    %v975 = vadd.f32 %v454, %v974
    %v976 = vpop.f32.mrb[0].mxu0
    %v977 = vadd.f32 %v458, %v976
    %v978 = vpop.f32.mrb[0].mxu0
    %v979 = vadd.f32 %v454, %v978
    %v980 = vpop.f32.mrb[0].mxu0
    %v981 = vadd.f32 %v458, %v980
    %982 = vdwg.mxu0
    %v983 = vmax.f32 %v712, %v865
    %v984 = vmax.f32 %v714, %v867
    %v985 = vmax.f32 %v716, %v869
    %v986 = vmax.f32 %v718, %v871
    %v987 = vmax.f32 %v722, %v875
    %v988 = vmax.f32 %v724, %v877
    %v989 = vmax.f32 %v726, %v879
    %v990 = vmax.f32 %v728, %v881
    %v991 = vmax.f32 %v732, %v885
    %v992 = vmax.f32 %v734, %v887
    %v993 = vmax.f32 %v736, %v889
    %v994 = vmax.f32 %v738, %v891
    %v995 = vmax.f32 %v742, %v895
    %v996 = vmax.f32 %v744, %v897
    %v997 = vmax.f32 %v746, %v899
    %v998 = vmax.f32 %v748, %v901
    %v999 = vmax.f32 %v752, %v905
    %v1000 = vmax.f32 %v754, %v907
    %v1001 = vmax.f32 %v756, %v909
    %v1002 = vmax.f32 %v758, %v911
    %v1003 = vmax.f32 %v762, %v915
    %v1004 = vmax.f32 %v764, %v917
    %v1005 = vmax.f32 %v766, %v919
    %v1006 = vmax.f32 %v768, %v921
    %v1007 = vmax.f32 %v772, %v925
    %v1008 = vmax.f32 %v774, %v927
    %v1009 = vmax.f32 %v776, %v929
    %v1010 = vmax.f32 %v778, %v931
    %v1011 = vmax.f32 %v782, %v935
    %v1012 = vmax.f32 %v784, %v937
    %v1013 = vmax.f32 %v786, %v939
    %v1014 = vmax.f32 %v788, %v941
    %v1015 = vmax.f32 %v792, %v945
    %v1016 = vmax.f32 %v794, %v947
    %v1017 = vmax.f32 %v796, %v949
    %v1018 = vmax.f32 %v798, %v951
    %v1019 = vmax.f32 %v802, %v955
    %v1020 = vmax.f32 %v804, %v957
    %v1021 = vmax.f32 %v806, %v959
    %v1022 = vmax.f32 %v808, %v961
    %v1023 = vmax.f32 %v812, %v965
    %v1024 = vmax.f32 %v814, %v967
    %v1025 = vmax.f32 %v816, %v969
    %v1026 = vmax.f32 %v818, %v971
    %v1027 = vmax.f32 %v822, %v975
    %v1028 = vmax.f32 %v824, %v977
    %v1029 = vmax.f32 %v826, %v979
    %v1030 = vmax.f32 %v828, %v981
    %v1031 = vmax.f32 %v983, %v985
    %v1032 = vmax.f32 %v984, %v986
    %v1033 = vmax.f32 %v987, %v989
    %v1034 = vmax.f32 %v988, %v990
    %v1035 = vmax.f32 %v991, %v993
    %v1036 = vmax.f32 %v992, %v994
    %v1037 = vmax.f32 %v995, %v997
    %v1038 = vmax.f32 %v996, %v998
    %v1039 = vmax.f32 %v999, %v1001
    %v1040 = vmax.f32 %v1000, %v1002
    %v1041 = vmax.f32 %v1003, %v1005
    %v1042 = vmax.f32 %v1004, %v1006
    %v1043 = vmax.f32 %v1007, %v1009
    %v1044 = vmax.f32 %v1008, %v1010
    %v1045 = vmax.f32 %v1011, %v1013
    %v1046 = vmax.f32 %v1012, %v1014
    %v1047 = vmax.f32 %v1015, %v1017
    %v1048 = vmax.f32 %v1016, %v1018
    %v1049 = vmax.f32 %v1019, %v1021
    %v1050 = vmax.f32 %v1020, %v1022
    %v1051 = vmax.f32 %v1023, %v1025
    %v1052 = vmax.f32 %v1024, %v1026
    %v1053 = vmax.f32 %v1027, %v1029
    %v1054 = vmax.f32 %v1028, %v1030
    %v1055 = vmax.f32 %v1031, 0.0
    %v1056 = vmax.f32 %v1032, 0.0
    %v1057 = vmax.f32 %v1033, 0.0
    %v1058 = vmax.f32 %v1034, 0.0
    %v1059 = vmax.f32 %v1035, 0.0
    %v1060 = vmax.f32 %v1036, 0.0
    %v1061 = vmax.f32 %v1037, 0.0
    %v1062 = vmax.f32 %v1038, 0.0
    %v1063 = vmax.f32 %v1039, 0.0
    %v1064 = vmax.f32 %v1040, 0.0
    %v1065 = vmax.f32 %v1041, 0.0
    %v1066 = vmax.f32 %v1042, 0.0
    %v1067 = vmax.f32 %v1043, 0.0
    %v1068 = vmax.f32 %v1044, 0.0
    %v1069 = vmax.f32 %v1045, 0.0
    %v1070 = vmax.f32 %v1046, 0.0
    %v1071 = vmax.f32 %v1047, 0.0
    %v1072 = vmax.f32 %v1048, 0.0
    %v1073 = vmax.f32 %v1049, 0.0
    %v1074 = vmax.f32 %v1050, 0.0
    %v1075 = vmax.f32 %v1051, 0.0
    %v1076 = vmax.f32 %v1052, 0.0
    %v1077 = vmax.f32 %v1053, 0.0
    %v1078 = vmax.f32 %v1054, 0.0
    %v1079 = vpack.c.bf16 %v1057, %v1055
    %v1080 = vpack.c.bf16 %v1058, %v1056
    %v1081 = vpack.c.bf16 %v1061, %v1059
    %v1082 = vpack.c.bf16 %v1062, %v1060
    %v1083 = vpack.c.bf16 %v1065, %v1063
    %v1084 = vpack.c.bf16 %v1066, %v1064
    %v1085 = vpack.c.bf16 %v1069, %v1067
    %v1086 = vpack.c.bf16 %v1070, %v1068
    %v1087 = vpack.c.bf16 %v1073, %v1071
    %v1088 = vpack.c.bf16 %v1074, %v1072
    %v1089 = vpack.c.bf16 %v1077, %v1075
    %v1090 = vpack.c.bf16 %v1078, %v1076
    %v1091 = vld [vmem:[#allocation4] sm:$0xff]
    %v1092 = vld [vmem:[#allocation4 + $0x8] sm:$0xff]
    %v1093 = vld [vmem:[#allocation4 + $0x10] sm:$0xff]
    %v1094 = vld [vmem:[#allocation4 + $0x18] sm:$0xff]
    %v1095 = vld [vmem:[#allocation4 + $0x20] sm:$0xff]
    %v1096 = vld [vmem:[#allocation4 + $0x28] sm:$0xff]
    %v1097 = vld [vmem:[#allocation4 + $0x30] sm:$0xff]
    %v1098 = vld [vmem:[#allocation4 + $0x38] sm:$0xff]
    %v1099 = vld [vmem:[#allocation4 + $0x40] sm:$0xff]
    %v1100 = vld [vmem:[#allocation4 + $0x48] sm:$0xff]
    %v1101 = vld [vmem:[#allocation4 + $0x50] sm:$0xff]
    %v1102 = vld [vmem:[#allocation4 + $0x58] sm:$0xff]
    %v1103 = vld [vmem:[#allocation4 + $0x60] sm:$0xff]
    %v1104 = vld [vmem:[#allocation4 + $0x68] sm:$0xff]
    %v1105 = vld [vmem:[#allocation4 + $0x70] sm:$0xff]
    %v1106 = vld [vmem:[#allocation4 + $0x78] sm:$0xff]
    %v1107 = vld [vmem:[#allocation4 + $0x80] sm:$0xff]
    %v1108 = vld [vmem:[#allocation4 + $0x88] sm:$0xff]
    %v1109 = vld [vmem:[#allocation4 + $0x90] sm:$0xff]
    %v1110 = vld [vmem:[#allocation4 + $0x98] sm:$0xff]
    %v1111 = vld [vmem:[#allocation4 + $0xa0] sm:$0xff]
    %v1112 = vld [vmem:[#allocation4 + $0xa8] sm:$0xff]
    %v1113 = vld [vmem:[#allocation4 + $0xb0] sm:$0xff]
    %v1114 = vld [vmem:[#allocation4 + $0xb8] sm:$0xff]
    %v1115 = vld [vmem:[#allocation4 + $0xc0] sm:$0xff]
    %v1116 = vld [vmem:[#allocation4 + $0xc8] sm:$0xff]
    %v1117 = vld [vmem:[#allocation4 + $0xd0] sm:$0xff]
    %v1118 = vld [vmem:[#allocation4 + $0xd8] sm:$0xff]
    %v1119 = vld [vmem:[#allocation4 + $0xe0] sm:$0xff]
    %v1120 = vld [vmem:[#allocation4 + $0xe8] sm:$0xff]
    %v1121 = vld [vmem:[#allocation4 + $0xf0] sm:$0xff]
    %v1122 = vld [vmem:[#allocation4 + $0xf8] sm:$0xff]
    %s1123 = scalar_lea.vmem [#allocation4], 256
    %v1124 = vld [vmem:[%s1123] sm:$0xff]
    %v1125 = vld [vmem:[%s1123 + $0x8] sm:$0xff]
    %v1126 = vld [vmem:[%s1123 + $0x10] sm:$0xff]
    %v1127 = vld [vmem:[%s1123 + $0x18] sm:$0xff]
    %v1128 = vld [vmem:[%s1123 + $0x20] sm:$0xff]
    %v1129 = vld [vmem:[%s1123 + $0x28] sm:$0xff]
    %v1130 = vld [vmem:[%s1123 + $0x30] sm:$0xff]
    %v1131 = vld [vmem:[%s1123 + $0x38] sm:$0xff]
    %v1132 = vld [vmem:[%s1123 + $0x40] sm:$0xff]
    %v1133 = vld [vmem:[%s1123 + $0x48] sm:$0xff]
    %v1134 = vld [vmem:[%s1123 + $0x50] sm:$0xff]
    %v1135 = vld [vmem:[%s1123 + $0x58] sm:$0xff]
    %v1136 = vld [vmem:[%s1123 + $0x60] sm:$0xff]
    %v1137 = vld [vmem:[%s1123 + $0x68] sm:$0xff]
    %v1138 = vld [vmem:[%s1123 + $0x70] sm:$0xff]
    %v1139 = vld [vmem:[%s1123 + $0x78] sm:$0xff]
    %v1140 = vld [vmem:[%s1123 + $0x80] sm:$0xff]
    %v1141 = vld [vmem:[%s1123 + $0x88] sm:$0xff]
    %v1142 = vld [vmem:[%s1123 + $0x90] sm:$0xff]
    %v1143 = vld [vmem:[%s1123 + $0x98] sm:$0xff]
    %v1144 = vld [vmem:[%s1123 + $0xa0] sm:$0xff]
    %v1145 = vld [vmem:[%s1123 + $0xa8] sm:$0xff]
    %v1146 = vld [vmem:[%s1123 + $0xb0] sm:$0xff]
    %v1147 = vld [vmem:[%s1123 + $0xb8] sm:$0xff]
    %v1148 = vld [vmem:[%s1123 + $0xc0] sm:$0xff]
    %v1149 = vld [vmem:[%s1123 + $0xc8] sm:$0xff]
    %v1150 = vld [vmem:[%s1123 + $0xd0] sm:$0xff]
    %v1151 = vld [vmem:[%s1123 + $0xd8] sm:$0xff]
    %v1152 = vld [vmem:[%s1123 + $0xe0] sm:$0xff]
    %v1153 = vld [vmem:[%s1123 + $0xe8] sm:$0xff]
    %v1154 = vld [vmem:[%s1123 + $0xf0] sm:$0xff]
    %v1155 = vld [vmem:[%s1123 + $0xf8] sm:$0xff]
    %vm1166 = vcmask 1043456
    %v1167 = vrot.slane %v1079, 4
    %v1168 = vrot.slane %v1081, 4
    %v1169 = vsel %vm1166, %v1167, %v1168
    %v1170 = vrot.slane %v1080, 4
    %v1171 = vrot.slane %v1082, 4
    %v1172 = vsel %vm1166, %v1170, %v1171
    %v1173 = vrot.slane %v1083, 4
    %v1174 = vsel %vm1166, %v1168, %v1173
    %v1175 = vrot.slane %v1084, 4
    %v1176 = vsel %vm1166, %v1171, %v1175
    %v1177 = vrot.slane %v1085, 4
    %v1178 = vsel %vm1166, %v1173, %v1177
    %v1179 = vrot.slane %v1086, 4
    %v1180 = vsel %vm1166, %v1175, %v1179
    %v1181 = vrot.slane %v1087, 4
    %v1182 = vsel %vm1166, %v1177, %v1181
    %v1183 = vrot.slane %v1088, 4
    %v1184 = vsel %vm1166, %v1179, %v1183
    %v1225 = vunpack.c.l.b16 %v1124
    %v1226 = vunpack.c.h.b16 %v1124
    %v1227 = vunpack.c.l.b16 %v1125
    %v1228 = vunpack.c.h.b16 %v1125
    %v1229 = vunpack.c.l.b16 %v1126
    %v1230 = vunpack.c.h.b16 %v1126
    %v1231 = vunpack.c.l.b16 %v1127
    %v1232 = vunpack.c.h.b16 %v1127
    %v1233 = vunpack.c.l.b16 %v1128
    %v1234 = vunpack.c.h.b16 %v1128
    %v1235 = vunpack.c.l.b16 %v1129
    %v1236 = vunpack.c.h.b16 %v1129
    %v1237 = vunpack.c.l.b16 %v1130
    %v1238 = vunpack.c.h.b16 %v1130
    %v1239 = vunpack.c.l.b16 %v1131
    %v1240 = vunpack.c.h.b16 %v1131
    %v1241 = vunpack.c.l.b16 %v1132
    %v1242 = vunpack.c.h.b16 %v1132
    %v1243 = vunpack.c.l.b16 %v1133
    %v1244 = vunpack.c.h.b16 %v1133
    %v1245 = vunpack.c.l.b16 %v1134
    %v1246 = vunpack.c.h.b16 %v1134
    %v1247 = vunpack.c.l.b16 %v1135
    %v1248 = vunpack.c.h.b16 %v1135
    %v1249 = vunpack.c.l.b16 %v1136
    %v1250 = vunpack.c.h.b16 %v1136
    %v1251 = vunpack.c.l.b16 %v1137
    %v1252 = vunpack.c.h.b16 %v1137
    %v1253 = vunpack.c.l.b16 %v1138
    %v1254 = vunpack.c.h.b16 %v1138
    %v1255 = vunpack.c.l.b16 %v1139
    %v1256 = vunpack.c.h.b16 %v1139
    %v1257 = vunpack.c.l.b16 %v1140
    %v1258 = vunpack.c.h.b16 %v1140
    %v1259 = vunpack.c.l.b16 %v1141
    %v1260 = vunpack.c.h.b16 %v1141
    %v1261 = vunpack.c.l.b16 %v1142
    %v1262 = vunpack.c.h.b16 %v1142
    %v1263 = vunpack.c.l.b16 %v1143
    %v1264 = vunpack.c.h.b16 %v1143
    %v1265 = vunpack.c.l.b16 %v1144
    %v1266 = vunpack.c.h.b16 %v1144
    %v1267 = vunpack.c.l.b16 %v1145
    %v1268 = vunpack.c.h.b16 %v1145
    %v1269 = vunpack.c.l.b16 %v1146
    %v1270 = vunpack.c.h.b16 %v1146
    %v1271 = vunpack.c.l.b16 %v1147
    %v1272 = vunpack.c.h.b16 %v1147
    %v1273 = vunpack.c.l.b16 %v1148
    %v1274 = vunpack.c.h.b16 %v1148
    %v1275 = vunpack.c.l.b16 %v1149
    %v1276 = vunpack.c.h.b16 %v1149
    %v1277 = vunpack.c.l.b16 %v1150
    %v1278 = vunpack.c.h.b16 %v1150
    %v1279 = vunpack.c.l.b16 %v1151
    %v1280 = vunpack.c.h.b16 %v1151
    %v1281 = vunpack.c.l.b16 %v1152
    %v1282 = vunpack.c.h.b16 %v1152
    %v1283 = vunpack.c.l.b16 %v1153
    %v1284 = vunpack.c.h.b16 %v1153
    %v1285 = vunpack.c.l.b16 %v1154
    %v1286 = vunpack.c.h.b16 %v1154
    %v1287 = vunpack.c.l.b16 %v1155
    %v1288 = vunpack.c.h.b16 %v1155
    %v1289 = vpack.c.b16 %v1227, %v1225
    %v1290 = vpack.c.b16 %v1228, %v1226
    %v1291 = vpack.c.b16 %v1231, %v1229
    %v1292 = vpack.c.b16 %v1232, %v1230
    %v1293 = vpack.c.b16 %v1235, %v1233
    %v1294 = vpack.c.b16 %v1236, %v1234
    %v1295 = vpack.c.b16 %v1239, %v1237
    %v1296 = vpack.c.b16 %v1240, %v1238
    %v1297 = vpack.c.b16 %v1243, %v1241
    %v1298 = vpack.c.b16 %v1244, %v1242
    %v1299 = vpack.c.b16 %v1247, %v1245
    %v1300 = vpack.c.b16 %v1248, %v1246
    %v1301 = vpack.c.b16 %v1251, %v1249
    %v1302 = vpack.c.b16 %v1252, %v1250
    %v1303 = vpack.c.b16 %v1255, %v1253
    %v1304 = vpack.c.b16 %v1256, %v1254
    %v1305 = vpack.c.b16 %v1259, %v1257
    %v1306 = vpack.c.b16 %v1260, %v1258
    %v1307 = vpack.c.b16 %v1263, %v1261
    %v1308 = vpack.c.b16 %v1264, %v1262
    %v1309 = vpack.c.b16 %v1267, %v1265
    %v1310 = vpack.c.b16 %v1268, %v1266
    %v1311 = vpack.c.b16 %v1271, %v1269
    %v1312 = vpack.c.b16 %v1272, %v1270
    %v1313 = vpack.c.b16 %v1275, %v1273
    %v1314 = vpack.c.b16 %v1276, %v1274
    %v1315 = vpack.c.b16 %v1279, %v1277
    %v1316 = vpack.c.b16 %v1280, %v1278
    %v1317 = vpack.c.b16 %v1283, %v1281
    %v1318 = vpack.c.b16 %v1284, %v1282
    %v1319 = vpack.c.b16 %v1287, %v1285
    %v1320 = vpack.c.b16 %v1288, %v1286
    %1353 = vmatprep.subr.bf16.mxu0 %v1290
    %1354 = vmatpush1.bf16.msra.mxu0 %v1289
    %1355 = vmatprep.subr.bf16.mxu0 %v1292
    %1356 = vmatpush1.bf16.msra.mxu0 %v1291
    %1357 = vmatprep.subr.bf16.mxu0 %v1294
    %1358 = vmatpush1.bf16.msra.mxu0 %v1293
    %1359 = vmatprep.subr.bf16.mxu0 %v1296
    %1360 = vmatpush1.bf16.msra.mxu0 %v1295
    %1361 = vmatprep.subr.bf16.mxu0 %v1298
    %1362 = vmatpush1.bf16.msra.mxu0 %v1297
    %1363 = vmatprep.subr.bf16.mxu0 %v1300
    %1364 = vmatpush1.bf16.msra.mxu0 %v1299
    %1365 = vmatprep.subr.bf16.mxu0 %v1302
    %1366 = vmatpush1.bf16.msra.mxu0 %v1301
    %1367 = vmatprep.subr.bf16.mxu0 %v1304
    %1368 = vmatpush1.bf16.msra.mxu0 %v1303
    %1369 = vmatprep.subr.bf16.mxu0 %v1306
    %1370 = vmatpush1.bf16.msra.mxu0 %v1305
    %1371 = vmatprep.subr.bf16.mxu0 %v1308
    %1372 = vmatpush1.bf16.msra.mxu0 %v1307
    %1373 = vmatprep.subr.bf16.mxu0 %v1310
    %1374 = vmatpush1.bf16.msra.mxu0 %v1309
    %1375 = vmatprep.subr.bf16.mxu0 %v1312
    %1376 = vmatpush1.bf16.msra.mxu0 %v1311
    %1377 = vmatprep.subr.bf16.mxu0 %v1314
    %1378 = vmatpush1.bf16.msra.mxu0 %v1313
    %1379 = vmatprep.subr.bf16.mxu0 %v1316
    %1380 = vmatpush1.bf16.msra.mxu0 %v1315
    %1381 = vmatprep.subr.bf16.mxu0 %v1318
    %1382 = vmatpush1.bf16.msra.mxu0 %v1317
    %1383 = vmatprep.subr.bf16.mxu0 %v1320
    %1384 = vmatpush1.bf16.msra.mxu0 %v1319
    %1385 = vmatprep.mubr.bf16.mxu0 %v1172
    %1386 = vmatmul.mubr.bf16.gmra.mrb[0].mxu0 %v1169
    %v1387 = vpop.f32.mrb[0].mxu0
    %v1388 = vadd.f32 0.0, %v1387
    %v1389 = vpop.f32.mrb[0].mxu0
    %v1390 = vadd.f32 0.0, %v1389
    %v1391 = vpop.f32.mrb[0].mxu0
    %v1392 = vadd.f32 0.0, %v1391
    %v1393 = vpop.f32.mrb[0].mxu0
    %v1394 = vadd.f32 0.0, %v1393
    %1395 = vmatprep.mubr.bf16.mxu0 %v1176
    %1396 = vmatmul.mubr.bf16.gmra.mrb[0].mxu0 %v1174
    %v1397 = vpop.f32.mrb[0].mxu0
    %v1398 = vadd.f32 0.0, %v1397
    %v1399 = vpop.f32.mrb[0].mxu0
    %v1400 = vadd.f32 0.0, %v1399
    %v1401 = vpop.f32.mrb[0].mxu0
    %v1402 = vadd.f32 0.0, %v1401
    %v1403 = vpop.f32.mrb[0].mxu0
    %v1404 = vadd.f32 0.0, %v1403
    %1405 = vmatprep.mubr.bf16.mxu0 %v1180
    %1406 = vmatmul.mubr.bf16.gmra.mrb[0].mxu0 %v1178
    %v1407 = vpop.f32.mrb[0].mxu0
    %v1408 = vadd.f32 0.0, %v1407
    %v1409 = vpop.f32.mrb[0].mxu0
    %v1410 = vadd.f32 0.0, %v1409
    %v1411 = vpop.f32.mrb[0].mxu0
    %v1412 = vadd.f32 0.0, %v1411
    %v1413 = vpop.f32.mrb[0].mxu0
    %v1414 = vadd.f32 0.0, %v1413
    %1415 = vmatprep.mubr.bf16.mxu0 %v1184
    %1416 = vmatmul.mubr.bf16.gmra.mrb[0].mxu0 %v1182
    %v1417 = vpop.f32.mrb[0].mxu0
    %v1418 = vadd.f32 0.0, %v1417
    %v1419 = vpop.f32.mrb[0].mxu0
    %v1420 = vadd.f32 0.0, %v1419
    %v1421 = vpop.f32.mrb[0].mxu0
    %v1422 = vadd.f32 0.0, %v1421
    %v1423 = vpop.f32.mrb[0].mxu0
    %v1424 = vadd.f32 0.0, %v1423
    %1425 = vdwg.mxu0
    %v1458 = vunpack.c.l.b16 %v1091
    %v1459 = vunpack.c.h.b16 %v1091
    %v1460 = vunpack.c.l.b16 %v1092
    %v1461 = vunpack.c.h.b16 %v1092
    %v1462 = vunpack.c.l.b16 %v1093
    %v1463 = vunpack.c.h.b16 %v1093
    %v1464 = vunpack.c.l.b16 %v1094
    %v1465 = vunpack.c.h.b16 %v1094
    %v1466 = vunpack.c.l.b16 %v1095
    %v1467 = vunpack.c.h.b16 %v1095
    %v1468 = vunpack.c.l.b16 %v1096
    %v1469 = vunpack.c.h.b16 %v1096
    %v1470 = vunpack.c.l.b16 %v1097
    %v1471 = vunpack.c.h.b16 %v1097
    %v1472 = vunpack.c.l.b16 %v1098
    %v1473 = vunpack.c.h.b16 %v1098
    %v1474 = vunpack.c.l.b16 %v1099
    %v1475 = vunpack.c.h.b16 %v1099
    %v1476 = vunpack.c.l.b16 %v1100
    %v1477 = vunpack.c.h.b16 %v1100
    %v1478 = vunpack.c.l.b16 %v1101
    %v1479 = vunpack.c.h.b16 %v1101
    %v1480 = vunpack.c.l.b16 %v1102
    %v1481 = vunpack.c.h.b16 %v1102
    %v1482 = vunpack.c.l.b16 %v1103
    %v1483 = vunpack.c.h.b16 %v1103
    %v1484 = vunpack.c.l.b16 %v1104
    %v1485 = vunpack.c.h.b16 %v1104
    %v1486 = vunpack.c.l.b16 %v1105
    %v1487 = vunpack.c.h.b16 %v1105
    %v1488 = vunpack.c.l.b16 %v1106
    %v1489 = vunpack.c.h.b16 %v1106
    %v1490 = vunpack.c.l.b16 %v1107
    %v1491 = vunpack.c.h.b16 %v1107
    %v1492 = vunpack.c.l.b16 %v1108
    %v1493 = vunpack.c.h.b16 %v1108
    %v1494 = vunpack.c.l.b16 %v1109
    %v1495 = vunpack.c.h.b16 %v1109
    %v1496 = vunpack.c.l.b16 %v1110
    %v1497 = vunpack.c.h.b16 %v1110
    %v1498 = vunpack.c.l.b16 %v1111
    %v1499 = vunpack.c.h.b16 %v1111
    %v1500 = vunpack.c.l.b16 %v1112
    %v1501 = vunpack.c.h.b16 %v1112
    %v1502 = vunpack.c.l.b16 %v1113
    %v1503 = vunpack.c.h.b16 %v1113
    %v1504 = vunpack.c.l.b16 %v1114
    %v1505 = vunpack.c.h.b16 %v1114
    %v1506 = vunpack.c.l.b16 %v1115
    %v1507 = vunpack.c.h.b16 %v1115
    %v1508 = vunpack.c.l.b16 %v1116
    %v1509 = vunpack.c.h.b16 %v1116
    %v1510 = vunpack.c.l.b16 %v1117
    %v1511 = vunpack.c.h.b16 %v1117
    %v1512 = vunpack.c.l.b16 %v1118
    %v1513 = vunpack.c.h.b16 %v1118
    %v1514 = vunpack.c.l.b16 %v1119
    %v1515 = vunpack.c.h.b16 %v1119
    %v1516 = vunpack.c.l.b16 %v1120
    %v1517 = vunpack.c.h.b16 %v1120
    %v1518 = vunpack.c.l.b16 %v1121
    %v1519 = vunpack.c.h.b16 %v1121
    %v1520 = vunpack.c.l.b16 %v1122
    %v1521 = vunpack.c.h.b16 %v1122
    %v1522 = vpack.c.b16 %v1460, %v1458
    %v1523 = vpack.c.b16 %v1461, %v1459
    %v1524 = vpack.c.b16 %v1464, %v1462
    %v1525 = vpack.c.b16 %v1465, %v1463
    %v1526 = vpack.c.b16 %v1468, %v1466
    %v1527 = vpack.c.b16 %v1469, %v1467
    %v1528 = vpack.c.b16 %v1472, %v1470
    %v1529 = vpack.c.b16 %v1473, %v1471
    %v1530 = vpack.c.b16 %v1476, %v1474
    %v1531 = vpack.c.b16 %v1477, %v1475
    %v1532 = vpack.c.b16 %v1480, %v1478
    %v1533 = vpack.c.b16 %v1481, %v1479
    %v1534 = vpack.c.b16 %v1484, %v1482
    %v1535 = vpack.c.b16 %v1485, %v1483
    %v1536 = vpack.c.b16 %v1488, %v1486
    %v1537 = vpack.c.b16 %v1489, %v1487
    %v1538 = vpack.c.b16 %v1492, %v1490
    %v1539 = vpack.c.b16 %v1493, %v1491
    %v1540 = vpack.c.b16 %v1496, %v1494
    %v1541 = vpack.c.b16 %v1497, %v1495
    %v1542 = vpack.c.b16 %v1500, %v1498
    %v1543 = vpack.c.b16 %v1501, %v1499
    %v1544 = vpack.c.b16 %v1504, %v1502
    %v1545 = vpack.c.b16 %v1505, %v1503
    %v1546 = vpack.c.b16 %v1508, %v1506
    %v1547 = vpack.c.b16 %v1509, %v1507
    %v1548 = vpack.c.b16 %v1512, %v1510
    %v1549 = vpack.c.b16 %v1513, %v1511
    %v1550 = vpack.c.b16 %v1516, %v1514
    %v1551 = vpack.c.b16 %v1517, %v1515
    %v1552 = vpack.c.b16 %v1520, %v1518
    %v1553 = vpack.c.b16 %v1521, %v1519
    %1586 = vmatprep.subr.bf16.mxu0 %v1523
    %1587 = vmatpush1.bf16.msra.mxu0 %v1522
    %1588 = vmatprep.subr.bf16.mxu0 %v1525
    %1589 = vmatpush1.bf16.msra.mxu0 %v1524
    %1590 = vmatprep.subr.bf16.mxu0 %v1527
    %1591 = vmatpush1.bf16.msra.mxu0 %v1526
    %1592 = vmatprep.subr.bf16.mxu0 %v1529
    %1593 = vmatpush1.bf16.msra.mxu0 %v1528
    %1594 = vmatprep.subr.bf16.mxu0 %v1531
    %1595 = vmatpush1.bf16.msra.mxu0 %v1530
    %1596 = vmatprep.subr.bf16.mxu0 %v1533
    %1597 = vmatpush1.bf16.msra.mxu0 %v1532
    %1598 = vmatprep.subr.bf16.mxu0 %v1535
    %1599 = vmatpush1.bf16.msra.mxu0 %v1534
    %1600 = vmatprep.subr.bf16.mxu0 %v1537
    %1601 = vmatpush1.bf16.msra.mxu0 %v1536
    %1602 = vmatprep.subr.bf16.mxu0 %v1539
    %1603 = vmatpush1.bf16.msra.mxu0 %v1538
    %1604 = vmatprep.subr.bf16.mxu0 %v1541
    %1605 = vmatpush1.bf16.msra.mxu0 %v1540
    %1606 = vmatprep.subr.bf16.mxu0 %v1543
    %1607 = vmatpush1.bf16.msra.mxu0 %v1542
    %1608 = vmatprep.subr.bf16.mxu0 %v1545
    %1609 = vmatpush1.bf16.msra.mxu0 %v1544
    %1610 = vmatprep.subr.bf16.mxu0 %v1547
    %1611 = vmatpush1.bf16.msra.mxu0 %v1546
    %1612 = vmatprep.subr.bf16.mxu0 %v1549
    %1613 = vmatpush1.bf16.msra.mxu0 %v1548
    %1614 = vmatprep.subr.bf16.mxu0 %v1551
    %1615 = vmatpush1.bf16.msra.mxu0 %v1550
    %1616 = vmatprep.subr.bf16.mxu0 %v1553
    %1617 = vmatpush1.bf16.msra.mxu0 %v1552
    %1618 = vmatprep.mubr.bf16.mxu0 %v1080
    %1619 = vmatmul.mubr.bf16.gmra.mrb[0].mxu0 %v1079
    %v1620 = vpop.f32.mrb[0].mxu0
    %v1621 = vadd.f32 %v1388, %v1620
    %v1622 = vpop.f32.mrb[0].mxu0
    %v1623 = vadd.f32 %v1390, %v1622
    %v1624 = vpop.f32.mrb[0].mxu0
    %v1625 = vadd.f32 %v1392, %v1624
    %v1626 = vpop.f32.mrb[0].mxu0
    %v1627 = vadd.f32 %v1394, %v1626
    %1628 = vmatprep.mubr.bf16.mxu0 %v1082
    %1629 = vmatmul.mubr.bf16.gmra.mrb[0].mxu0 %v1081
    %v1630 = vpop.f32.mrb[0].mxu0
    %v1631 = vadd.f32 %v1398, %v1630
    %v1632 = vpop.f32.mrb[0].mxu0
    %v1633 = vadd.f32 %v1400, %v1632
    %v1634 = vpop.f32.mrb[0].mxu0
    %v1635 = vadd.f32 %v1402, %v1634
    %v1636 = vpop.f32.mrb[0].mxu0
    %v1637 = vadd.f32 %v1404, %v1636
    %1638 = vmatprep.mubr.bf16.mxu0 %v1084
    %1639 = vmatmul.mubr.bf16.gmra.mrb[0].mxu0 %v1083
    %v1640 = vpop.f32.mrb[0].mxu0
    %v1641 = vadd.f32 %v1408, %v1640
    %v1642 = vpop.f32.mrb[0].mxu0
    %v1643 = vadd.f32 %v1410, %v1642
    %v1644 = vpop.f32.mrb[0].mxu0
    %v1645 = vadd.f32 %v1412, %v1644
    %v1646 = vpop.f32.mrb[0].mxu0
    %v1647 = vadd.f32 %v1414, %v1646
    %1648 = vmatprep.mubr.bf16.mxu0 %v1086
    %1649 = vmatmul.mubr.bf16.gmra.mrb[0].mxu0 %v1085
    %v1650 = vpop.f32.mrb[0].mxu0
    %v1651 = vadd.f32 %v1418, %v1650
    %v1652 = vpop.f32.mrb[0].mxu0
    %v1653 = vadd.f32 %v1420, %v1652
    %v1654 = vpop.f32.mrb[0].mxu0
    %v1655 = vadd.f32 %v1422, %v1654
    %v1656 = vpop.f32.mrb[0].mxu0
    %v1657 = vadd.f32 %v1424, %v1656
    %1658 = vdwg.mxu0
    %s1659 = scalar_lea.vmem [#allocation4], 512
    %v1660 = vld [vmem:[%s1659] sm:$0xff]
    %v1661 = vld [vmem:[%s1659 + $0x8] sm:$0xff]
    %v1662 = vld [vmem:[%s1659 + $0x10] sm:$0xff]
    %v1663 = vld [vmem:[%s1659 + $0x18] sm:$0xff]
    %v1664 = vld [vmem:[%s1659 + $0x20] sm:$0xff]
    %v1665 = vld [vmem:[%s1659 + $0x28] sm:$0xff]
    %v1666 = vld [vmem:[%s1659 + $0x30] sm:$0xff]
    %v1667 = vld [vmem:[%s1659 + $0x38] sm:$0xff]
    %v1668 = vld [vmem:[%s1659 + $0x40] sm:$0xff]
    %v1669 = vld [vmem:[%s1659 + $0x48] sm:$0xff]
    %v1670 = vld [vmem:[%s1659 + $0x50] sm:$0xff]
    %v1671 = vld [vmem:[%s1659 + $0x58] sm:$0xff]
    %v1672 = vld [vmem:[%s1659 + $0x60] sm:$0xff]
    %v1673 = vld [vmem:[%s1659 + $0x68] sm:$0xff]
    %v1674 = vld [vmem:[%s1659 + $0x70] sm:$0xff]
    %v1675 = vld [vmem:[%s1659 + $0x78] sm:$0xff]
    %v1676 = vld [vmem:[%s1659 + $0x80] sm:$0xff]
    %v1677 = vld [vmem:[%s1659 + $0x88] sm:$0xff]
    %v1678 = vld [vmem:[%s1659 + $0x90] sm:$0xff]
    %v1679 = vld [vmem:[%s1659 + $0x98] sm:$0xff]
    %v1680 = vld [vmem:[%s1659 + $0xa0] sm:$0xff]
    %v1681 = vld [vmem:[%s1659 + $0xa8] sm:$0xff]
    %v1682 = vld [vmem:[%s1659 + $0xb0] sm:$0xff]
    %v1683 = vld [vmem:[%s1659 + $0xb8] sm:$0xff]
    %v1684 = vld [vmem:[%s1659 + $0xc0] sm:$0xff]
    %v1685 = vld [vmem:[%s1659 + $0xc8] sm:$0xff]
    %v1686 = vld [vmem:[%s1659 + $0xd0] sm:$0xff]
    %v1687 = vld [vmem:[%s1659 + $0xd8] sm:$0xff]
    %v1688 = vld [vmem:[%s1659 + $0xe0] sm:$0xff]
    %v1689 = vld [vmem:[%s1659 + $0xe8] sm:$0xff]
    %v1690 = vld [vmem:[%s1659 + $0xf0] sm:$0xff]
    %v1691 = vld [vmem:[%s1659 + $0xf8] sm:$0xff]
    %v1724 = vunpack.c.l.b16 %v1660
    %v1725 = vunpack.c.h.b16 %v1660
    %v1726 = vunpack.c.l.b16 %v1661
    %v1727 = vunpack.c.h.b16 %v1661
    %v1728 = vunpack.c.l.b16 %v1662
    %v1729 = vunpack.c.h.b16 %v1662
    %v1730 = vunpack.c.l.b16 %v1663
    %v1731 = vunpack.c.h.b16 %v1663
    %v1732 = vunpack.c.l.b16 %v1664
    %v1733 = vunpack.c.h.b16 %v1664
    %v1734 = vunpack.c.l.b16 %v1665
    %v1735 = vunpack.c.h.b16 %v1665
    %v1736 = vunpack.c.l.b16 %v1666
    %v1737 = vunpack.c.h.b16 %v1666
    %v1738 = vunpack.c.l.b16 %v1667
    %v1739 = vunpack.c.h.b16 %v1667
    %v1740 = vunpack.c.l.b16 %v1668
    %v1741 = vunpack.c.h.b16 %v1668
    %v1742 = vunpack.c.l.b16 %v1669
    %v1743 = vunpack.c.h.b16 %v1669
    %v1744 = vunpack.c.l.b16 %v1670
    %v1745 = vunpack.c.h.b16 %v1670
    %v1746 = vunpack.c.l.b16 %v1671
    %v1747 = vunpack.c.h.b16 %v1671
    %v1748 = vunpack.c.l.b16 %v1672
    %v1749 = vunpack.c.h.b16 %v1672
    %v1750 = vunpack.c.l.b16 %v1673
    %v1751 = vunpack.c.h.b16 %v1673
    %v1752 = vunpack.c.l.b16 %v1674
    %v1753 = vunpack.c.h.b16 %v1674
    %v1754 = vunpack.c.l.b16 %v1675
    %v1755 = vunpack.c.h.b16 %v1675
    %v1756 = vunpack.c.l.b16 %v1676
    %v1757 = vunpack.c.h.b16 %v1676
    %v1758 = vunpack.c.l.b16 %v1677
    %v1759 = vunpack.c.h.b16 %v1677
    %v1760 = vunpack.c.l.b16 %v1678
    %v1761 = vunpack.c.h.b16 %v1678
    %v1762 = vunpack.c.l.b16 %v1679
    %v1763 = vunpack.c.h.b16 %v1679
    %v1764 = vunpack.c.l.b16 %v1680
    %v1765 = vunpack.c.h.b16 %v1680
    %v1766 = vunpack.c.l.b16 %v1681
    %v1767 = vunpack.c.h.b16 %v1681
    %v1768 = vunpack.c.l.b16 %v1682
    %v1769 = vunpack.c.h.b16 %v1682
    %v1770 = vunpack.c.l.b16 %v1683
    %v1771 = vunpack.c.h.b16 %v1683
    %v1772 = vunpack.c.l.b16 %v1684
    %v1773 = vunpack.c.h.b16 %v1684
    %v1774 = vunpack.c.l.b16 %v1685
    %v1775 = vunpack.c.h.b16 %v1685
    %v1776 = vunpack.c.l.b16 %v1686
    %v1777 = vunpack.c.h.b16 %v1686
    %v1778 = vunpack.c.l.b16 %v1687
    %v1779 = vunpack.c.h.b16 %v1687
    %v1780 = vunpack.c.l.b16 %v1688
    %v1781 = vunpack.c.h.b16 %v1688
    %v1782 = vunpack.c.l.b16 %v1689
    %v1783 = vunpack.c.h.b16 %v1689
    %v1784 = vunpack.c.l.b16 %v1690
    %v1785 = vunpack.c.h.b16 %v1690
    %v1786 = vunpack.c.l.b16 %v1691
    %v1787 = vunpack.c.h.b16 %v1691
    %v1788 = vpack.c.b16 %v1726, %v1724
    %v1789 = vpack.c.b16 %v1727, %v1725
    %v1790 = vpack.c.b16 %v1730, %v1728
    %v1791 = vpack.c.b16 %v1731, %v1729
    %v1792 = vpack.c.b16 %v1734, %v1732
    %v1793 = vpack.c.b16 %v1735, %v1733
    %v1794 = vpack.c.b16 %v1738, %v1736
    %v1795 = vpack.c.b16 %v1739, %v1737
    %v1796 = vpack.c.b16 %v1742, %v1740
    %v1797 = vpack.c.b16 %v1743, %v1741
    %v1798 = vpack.c.b16 %v1746, %v1744
    %v1799 = vpack.c.b16 %v1747, %v1745
    %v1800 = vpack.c.b16 %v1750, %v1748
    %v1801 = vpack.c.b16 %v1751, %v1749
    %v1802 = vpack.c.b16 %v1754, %v1752
    %v1803 = vpack.c.b16 %v1755, %v1753
    %v1804 = vpack.c.b16 %v1758, %v1756
    %v1805 = vpack.c.b16 %v1759, %v1757
    %v1806 = vpack.c.b16 %v1762, %v1760
    %v1807 = vpack.c.b16 %v1763, %v1761
    %v1808 = vpack.c.b16 %v1766, %v1764
    %v1809 = vpack.c.b16 %v1767, %v1765
    %v1810 = vpack.c.b16 %v1770, %v1768
    %v1811 = vpack.c.b16 %v1771, %v1769
    %v1812 = vpack.c.b16 %v1774, %v1772
    %v1813 = vpack.c.b16 %v1775, %v1773
    %v1814 = vpack.c.b16 %v1778, %v1776
    %v1815 = vpack.c.b16 %v1779, %v1777
    %v1816 = vpack.c.b16 %v1782, %v1780
    %v1817 = vpack.c.b16 %v1783, %v1781
    %v1818 = vpack.c.b16 %v1786, %v1784
    %v1819 = vpack.c.b16 %v1787, %v1785
    %1852 = vmatprep.subr.bf16.mxu0 %v1789
    %1853 = vmatpush1.bf16.msra.mxu0 %v1788
    %1854 = vmatprep.subr.bf16.mxu0 %v1791
    %1855 = vmatpush1.bf16.msra.mxu0 %v1790
    %1856 = vmatprep.subr.bf16.mxu0 %v1793
    %1857 = vmatpush1.bf16.msra.mxu0 %v1792
    %1858 = vmatprep.subr.bf16.mxu0 %v1795
    %1859 = vmatpush1.bf16.msra.mxu0 %v1794
    %1860 = vmatprep.subr.bf16.mxu0 %v1797
    %1861 = vmatpush1.bf16.msra.mxu0 %v1796
    %1862 = vmatprep.subr.bf16.mxu0 %v1799
    %1863 = vmatpush1.bf16.msra.mxu0 %v1798
    %1864 = vmatprep.subr.bf16.mxu0 %v1801
    %1865 = vmatpush1.bf16.msra.mxu0 %v1800
    %1866 = vmatprep.subr.bf16.mxu0 %v1803
    %1867 = vmatpush1.bf16.msra.mxu0 %v1802
    %1868 = vmatprep.subr.bf16.mxu0 %v1805
    %1869 = vmatpush1.bf16.msra.mxu0 %v1804
    %1870 = vmatprep.subr.bf16.mxu0 %v1807
    %1871 = vmatpush1.bf16.msra.mxu0 %v1806
    %1872 = vmatprep.subr.bf16.mxu0 %v1809
    %1873 = vmatpush1.bf16.msra.mxu0 %v1808
    %1874 = vmatprep.subr.bf16.mxu0 %v1811
    %1875 = vmatpush1.bf16.msra.mxu0 %v1810
    %1876 = vmatprep.subr.bf16.mxu0 %v1813
    %1877 = vmatpush1.bf16.msra.mxu0 %v1812
    %1878 = vmatprep.subr.bf16.mxu0 %v1815
    %1879 = vmatpush1.bf16.msra.mxu0 %v1814
    %1880 = vmatprep.subr.bf16.mxu0 %v1817
    %1881 = vmatpush1.bf16.msra.mxu0 %v1816
    %1882 = vmatprep.subr.bf16.mxu0 %v1819
    %1883 = vmatpush1.bf16.msra.mxu0 %v1818
    %1884 = vmatprep.mubr.bf16.mxu0 %v1082
    %1885 = vmatmul.mubr.bf16.gmra.mrb[0].mxu0 %v1081
    %v1886 = vpop.f32.mrb[0].mxu0
    %v1887 = vadd.f32 0.0, %v1886
    %v1888 = vpop.f32.mrb[0].mxu0
    %v1889 = vadd.f32 0.0, %v1888
    %v1890 = vpop.f32.mrb[0].mxu0
    %v1891 = vadd.f32 0.0, %v1890
    %v1892 = vpop.f32.mrb[0].mxu0
    %v1893 = vadd.f32 0.0, %v1892
    %1894 = vmatprep.mubr.bf16.mxu0 %v1084
    %1895 = vmatmul.mubr.bf16.gmra.mrb[0].mxu0 %v1083
    %v1896 = vpop.f32.mrb[0].mxu0
    %v1897 = vadd.f32 0.0, %v1896
    %v1898 = vpop.f32.mrb[0].mxu0
    %v1899 = vadd.f32 0.0, %v1898
    %v1900 = vpop.f32.mrb[0].mxu0
    %v1901 = vadd.f32 0.0, %v1900
    %v1902 = vpop.f32.mrb[0].mxu0
    %v1903 = vadd.f32 0.0, %v1902
    %1904 = vmatprep.mubr.bf16.mxu0 %v1086
    %1905 = vmatmul.mubr.bf16.gmra.mrb[0].mxu0 %v1085
    %v1906 = vpop.f32.mrb[0].mxu0
    %v1907 = vadd.f32 0.0, %v1906
    %v1908 = vpop.f32.mrb[0].mxu0
    %v1909 = vadd.f32 0.0, %v1908
    %v1910 = vpop.f32.mrb[0].mxu0
    %v1911 = vadd.f32 0.0, %v1910
    %v1912 = vpop.f32.mrb[0].mxu0
    %v1913 = vadd.f32 0.0, %v1912
    %1914 = vmatprep.mubr.bf16.mxu0 %v1088
    %1915 = vmatmul.mubr.bf16.gmra.mrb[0].mxu0 %v1087
    %v1916 = vpop.f32.mrb[0].mxu0
    %v1917 = vadd.f32 0.0, %v1916
    %v1918 = vpop.f32.mrb[0].mxu0
    %v1919 = vadd.f32 0.0, %v1918
    %v1920 = vpop.f32.mrb[0].mxu0
    %v1921 = vadd.f32 0.0, %v1920
    %v1922 = vpop.f32.mrb[0].mxu0
    %v1923 = vadd.f32 0.0, %v1922
    %1924 = vdwg.mxu0
    %v1925 = vadd.f32 %v1621, %v1887
    %v1926 = vadd.f32 %v1623, %v1889
    %v1927 = vadd.f32 %v1625, %v1891
    %v1928 = vadd.f32 %v1627, %v1893
    %v1929 = vadd.f32 %v1631, %v1897
    %v1930 = vadd.f32 %v1633, %v1899
    %v1931 = vadd.f32 %v1635, %v1901
    %v1932 = vadd.f32 %v1637, %v1903
    %v1933 = vadd.f32 %v1641, %v1907
    %v1934 = vadd.f32 %v1643, %v1909
    %v1935 = vadd.f32 %v1645, %v1911
    %v1936 = vadd.f32 %v1647, %v1913
    %v1937 = vadd.f32 %v1651, %v1917
    %v1938 = vadd.f32 %v1653, %v1919
    %v1939 = vadd.f32 %v1655, %v1921
    %v1940 = vadd.f32 %v1657, %v1923
    %s1941 = scalar_lea.vmem [#allocation4], 768
    %v1942 = vld [vmem:[%s1941] sm:$0xff]
    %v1943 = vld [vmem:[%s1941 + $0x8] sm:$0xff]
    %v1944 = vld [vmem:[%s1941 + $0x10] sm:$0xff]
    %v1945 = vld [vmem:[%s1941 + $0x18] sm:$0xff]
    %v1946 = vld [vmem:[%s1941 + $0x20] sm:$0xff]
    %v1947 = vld [vmem:[%s1941 + $0x28] sm:$0xff]
    %v1948 = vld [vmem:[%s1941 + $0x30] sm:$0xff]
    %v1949 = vld [vmem:[%s1941 + $0x38] sm:$0xff]
    %v1950 = vld [vmem:[%s1941 + $0x40] sm:$0xff]
    %v1951 = vld [vmem:[%s1941 + $0x48] sm:$0xff]
    %v1952 = vld [vmem:[%s1941 + $0x50] sm:$0xff]
    %v1953 = vld [vmem:[%s1941 + $0x58] sm:$0xff]
    %v1954 = vld [vmem:[%s1941 + $0x60] sm:$0xff]
    %v1955 = vld [vmem:[%s1941 + $0x68] sm:$0xff]
    %v1956 = vld [vmem:[%s1941 + $0x70] sm:$0xff]
    %v1957 = vld [vmem:[%s1941 + $0x78] sm:$0xff]
    %v1958 = vld [vmem:[%s1941 + $0x80] sm:$0xff]
    %v1959 = vld [vmem:[%s1941 + $0x88] sm:$0xff]
    %v1960 = vld [vmem:[%s1941 + $0x90] sm:$0xff]
    %v1961 = vld [vmem:[%s1941 + $0x98] sm:$0xff]
    %v1962 = vld [vmem:[%s1941 + $0xa0] sm:$0xff]
    %v1963 = vld [vmem:[%s1941 + $0xa8] sm:$0xff]
    %v1964 = vld [vmem:[%s1941 + $0xb0] sm:$0xff]
    %v1965 = vld [vmem:[%s1941 + $0xb8] sm:$0xff]
    %v1966 = vld [vmem:[%s1941 + $0xc0] sm:$0xff]
    %v1967 = vld [vmem:[%s1941 + $0xc8] sm:$0xff]
    %v1968 = vld [vmem:[%s1941 + $0xd0] sm:$0xff]
    %v1969 = vld [vmem:[%s1941 + $0xd8] sm:$0xff]
    %v1970 = vld [vmem:[%s1941 + $0xe0] sm:$0xff]
    %v1971 = vld [vmem:[%s1941 + $0xe8] sm:$0xff]
    %v1972 = vld [vmem:[%s1941 + $0xf0] sm:$0xff]
    %v1973 = vld [vmem:[%s1941 + $0xf8] sm:$0xff]
    %v1976 = vrot.slane %v1089, 4
    %v1977 = vsel %vm1166, %v1181, %v1976
    %v1978 = vrot.slane %v1090, 4
    %v1979 = vsel %vm1166, %v1183, %v1978
    %v2014 = vunpack.c.l.b16 %v1942
    %v2015 = vunpack.c.h.b16 %v1942
    %v2016 = vunpack.c.l.b16 %v1943
    %v2017 = vunpack.c.h.b16 %v1943
    %v2018 = vunpack.c.l.b16 %v1944
    %v2019 = vunpack.c.h.b16 %v1944
    %v2020 = vunpack.c.l.b16 %v1945
    %v2021 = vunpack.c.h.b16 %v1945
    %v2022 = vunpack.c.l.b16 %v1946
    %v2023 = vunpack.c.h.b16 %v1946
    %v2024 = vunpack.c.l.b16 %v1947
    %v2025 = vunpack.c.h.b16 %v1947
    %v2026 = vunpack.c.l.b16 %v1948
    %v2027 = vunpack.c.h.b16 %v1948
    %v2028 = vunpack.c.l.b16 %v1949
    %v2029 = vunpack.c.h.b16 %v1949
    %v2030 = vunpack.c.l.b16 %v1950
    %v2031 = vunpack.c.h.b16 %v1950
    %v2032 = vunpack.c.l.b16 %v1951
    %v2033 = vunpack.c.h.b16 %v1951
    %v2034 = vunpack.c.l.b16 %v1952
    %v2035 = vunpack.c.h.b16 %v1952
    %v2036 = vunpack.c.l.b16 %v1953
    %v2037 = vunpack.c.h.b16 %v1953
    %v2038 = vunpack.c.l.b16 %v1954
    %v2039 = vunpack.c.h.b16 %v1954
    %v2040 = vunpack.c.l.b16 %v1955
    %v2041 = vunpack.c.h.b16 %v1955
    %v2042 = vunpack.c.l.b16 %v1956
    %v2043 = vunpack.c.h.b16 %v1956
    %v2044 = vunpack.c.l.b16 %v1957
    %v2045 = vunpack.c.h.b16 %v1957
    %v2046 = vunpack.c.l.b16 %v1958
    %v2047 = vunpack.c.h.b16 %v1958
    %v2048 = vunpack.c.l.b16 %v1959
    %v2049 = vunpack.c.h.b16 %v1959
    %v2050 = vunpack.c.l.b16 %v1960
    %v2051 = vunpack.c.h.b16 %v1960
    %v2052 = vunpack.c.l.b16 %v1961
    %v2053 = vunpack.c.h.b16 %v1961
    %v2054 = vunpack.c.l.b16 %v1962
    %v2055 = vunpack.c.h.b16 %v1962
    %v2056 = vunpack.c.l.b16 %v1963
    %v2057 = vunpack.c.h.b16 %v1963
    %v2058 = vunpack.c.l.b16 %v1964
    %v2059 = vunpack.c.h.b16 %v1964
    %v2060 = vunpack.c.l.b16 %v1965
    %v2061 = vunpack.c.h.b16 %v1965
    %v2062 = vunpack.c.l.b16 %v1966
    %v2063 = vunpack.c.h.b16 %v1966
    %v2064 = vunpack.c.l.b16 %v1967
    %v2065 = vunpack.c.h.b16 %v1967
    %v2066 = vunpack.c.l.b16 %v1968
    %v2067 = vunpack.c.h.b16 %v1968
    %v2068 = vunpack.c.l.b16 %v1969
    %v2069 = vunpack.c.h.b16 %v1969
    %v2070 = vunpack.c.l.b16 %v1970
    %v2071 = vunpack.c.h.b16 %v1970
    %v2072 = vunpack.c.l.b16 %v1971
    %v2073 = vunpack.c.h.b16 %v1971
    %v2074 = vunpack.c.l.b16 %v1972
    %v2075 = vunpack.c.h.b16 %v1972
    %v2076 = vunpack.c.l.b16 %v1973
    %v2077 = vunpack.c.h.b16 %v1973
    %v2078 = vpack.c.b16 %v2016, %v2014
    %v2079 = vpack.c.b16 %v2017, %v2015
    %v2080 = vpack.c.b16 %v2020, %v2018
    %v2081 = vpack.c.b16 %v2021, %v2019
    %v2082 = vpack.c.b16 %v2024, %v2022
    %v2083 = vpack.c.b16 %v2025, %v2023
    %v2084 = vpack.c.b16 %v2028, %v2026
    %v2085 = vpack.c.b16 %v2029, %v2027
    %v2086 = vpack.c.b16 %v2032, %v2030
    %v2087 = vpack.c.b16 %v2033, %v2031
    %v2088 = vpack.c.b16 %v2036, %v2034
    %v2089 = vpack.c.b16 %v2037, %v2035
    %v2090 = vpack.c.b16 %v2040, %v2038
    %v2091 = vpack.c.b16 %v2041, %v2039
    %v2092 = vpack.c.b16 %v2044, %v2042
    %v2093 = vpack.c.b16 %v2045, %v2043
    %v2094 = vpack.c.b16 %v2048, %v2046
    %v2095 = vpack.c.b16 %v2049, %v2047
    %v2096 = vpack.c.b16 %v2052, %v2050
    %v2097 = vpack.c.b16 %v2053, %v2051
    %v2098 = vpack.c.b16 %v2056, %v2054
    %v2099 = vpack.c.b16 %v2057, %v2055
    %v2100 = vpack.c.b16 %v2060, %v2058
    %v2101 = vpack.c.b16 %v2061, %v2059
    %v2102 = vpack.c.b16 %v2064, %v2062
    %v2103 = vpack.c.b16 %v2065, %v2063
    %v2104 = vpack.c.b16 %v2068, %v2066
    %v2105 = vpack.c.b16 %v2069, %v2067
    %v2106 = vpack.c.b16 %v2072, %v2070
    %v2107 = vpack.c.b16 %v2073, %v2071
    %v2108 = vpack.c.b16 %v2076, %v2074
    %v2109 = vpack.c.b16 %v2077, %v2075
    %2142 = vmatprep.subr.bf16.mxu0 %v2079
    %2143 = vmatpush1.bf16.msra.mxu0 %v2078
    %2144 = vmatprep.subr.bf16.mxu0 %v2081
    %2145 = vmatpush1.bf16.msra.mxu0 %v2080
    %2146 = vmatprep.subr.bf16.mxu0 %v2083
    %2147 = vmatpush1.bf16.msra.mxu0 %v2082
    %2148 = vmatprep.subr.bf16.mxu0 %v2085
    %2149 = vmatpush1.bf16.msra.mxu0 %v2084
    %2150 = vmatprep.subr.bf16.mxu0 %v2087
    %2151 = vmatpush1.bf16.msra.mxu0 %v2086
    %2152 = vmatprep.subr.bf16.mxu0 %v2089
    %2153 = vmatpush1.bf16.msra.mxu0 %v2088
    %2154 = vmatprep.subr.bf16.mxu0 %v2091
    %2155 = vmatpush1.bf16.msra.mxu0 %v2090
    %2156 = vmatprep.subr.bf16.mxu0 %v2093
    %2157 = vmatpush1.bf16.msra.mxu0 %v2092
    %2158 = vmatprep.subr.bf16.mxu0 %v2095
    %2159 = vmatpush1.bf16.msra.mxu0 %v2094
    %2160 = vmatprep.subr.bf16.mxu0 %v2097
    %2161 = vmatpush1.bf16.msra.mxu0 %v2096
    %2162 = vmatprep.subr.bf16.mxu0 %v2099
    %2163 = vmatpush1.bf16.msra.mxu0 %v2098
    %2164 = vmatprep.subr.bf16.mxu0 %v2101
    %2165 = vmatpush1.bf16.msra.mxu0 %v2100
    %2166 = vmatprep.subr.bf16.mxu0 %v2103
    %2167 = vmatpush1.bf16.msra.mxu0 %v2102
    %2168 = vmatprep.subr.bf16.mxu0 %v2105
    %2169 = vmatpush1.bf16.msra.mxu0 %v2104
    %2170 = vmatprep.subr.bf16.mxu0 %v2107
    %2171 = vmatpush1.bf16.msra.mxu0 %v2106
    %2172 = vmatprep.subr.bf16.mxu0 %v2109
    %2173 = vmatpush1.bf16.msra.mxu0 %v2108
    %2174 = vmatprep.mubr.bf16.mxu0 %v1176
    %2175 = vmatmul.mubr.bf16.gmra.mrb[0].mxu0 %v1174
    %v2176 = vpop.f32.mrb[0].mxu0
    %v2177 = vadd.f32 0.0, %v2176
    %v2178 = vpop.f32.mrb[0].mxu0
    %v2179 = vadd.f32 0.0, %v2178
    %v2180 = vpop.f32.mrb[0].mxu0
    %v2181 = vadd.f32 0.0, %v2180
    %v2182 = vpop.f32.mrb[0].mxu0
    %v2183 = vadd.f32 0.0, %v2182
    %2184 = vmatprep.mubr.bf16.mxu0 %v1180
    %2185 = vmatmul.mubr.bf16.gmra.mrb[0].mxu0 %v1178
    %v2186 = vpop.f32.mrb[0].mxu0
    %v2187 = vadd.f32 0.0, %v2186
    %v2188 = vpop.f32.mrb[0].mxu0
    %v2189 = vadd.f32 0.0, %v2188
    %v2190 = vpop.f32.mrb[0].mxu0
    %v2191 = vadd.f32 0.0, %v2190
    %v2192 = vpop.f32.mrb[0].mxu0
    %v2193 = vadd.f32 0.0, %v2192
    %2194 = vmatprep.mubr.bf16.mxu0 %v1184
    %2195 = vmatmul.mubr.bf16.gmra.mrb[0].mxu0 %v1182
    %v2196 = vpop.f32.mrb[0].mxu0
    %v2197 = vadd.f32 0.0, %v2196
    %v2198 = vpop.f32.mrb[0].mxu0
    %v2199 = vadd.f32 0.0, %v2198
    %v2200 = vpop.f32.mrb[0].mxu0
    %v2201 = vadd.f32 0.0, %v2200
    %v2202 = vpop.f32.mrb[0].mxu0
    %v2203 = vadd.f32 0.0, %v2202
    %2204 = vmatprep.mubr.bf16.mxu0 %v1979
    %2205 = vmatmul.mubr.bf16.gmra.mrb[0].mxu0 %v1977
    %v2206 = vpop.f32.mrb[0].mxu0
    %v2207 = vadd.f32 0.0, %v2206
    %v2208 = vpop.f32.mrb[0].mxu0
    %v2209 = vadd.f32 0.0, %v2208
    %v2210 = vpop.f32.mrb[0].mxu0
    %v2211 = vadd.f32 0.0, %v2210
    %v2212 = vpop.f32.mrb[0].mxu0
    %v2213 = vadd.f32 0.0, %v2212
    %2214 = vdwg.mxu0
    %v2215 = vadd.f32 %v1925, %v2177
    %v2216 = vadd.f32 %v1926, %v2179
    %v2217 = vadd.f32 %v1927, %v2181
    %v2218 = vadd.f32 %v1928, %v2183
    %v2219 = vadd.f32 %v1929, %v2187
    %v2220 = vadd.f32 %v1930, %v2189
    %v2221 = vadd.f32 %v1931, %v2191
    %v2222 = vadd.f32 %v1932, %v2193
    %v2223 = vadd.f32 %v1933, %v2197
    %v2224 = vadd.f32 %v1934, %v2199
    %v2225 = vadd.f32 %v1935, %v2201
    %v2226 = vadd.f32 %v1936, %v2203
    %v2227 = vadd.f32 %v1937, %v2207
    %v2228 = vadd.f32 %v1938, %v2209
    %v2229 = vadd.f32 %v1939, %v2211
    %v2230 = vadd.f32 %v1940, %v2213
    %s2231 = scalar_lea.vmem [#allocation4], 1024
    %v2232 = vld [vmem:[%s2231] sm:$0xff]
    %v2233 = vld [vmem:[%s2231 + $0x8] sm:$0xff]
    %v2234 = vld [vmem:[%s2231 + $0x10] sm:$0xff]
    %v2235 = vld [vmem:[%s2231 + $0x18] sm:$0xff]
    %v2236 = vld [vmem:[%s2231 + $0x20] sm:$0xff]
    %v2237 = vld [vmem:[%s2231 + $0x28] sm:$0xff]
    %v2238 = vld [vmem:[%s2231 + $0x30] sm:$0xff]
    %v2239 = vld [vmem:[%s2231 + $0x38] sm:$0xff]
    %v2240 = vld [vmem:[%s2231 + $0x40] sm:$0xff]
    %v2241 = vld [vmem:[%s2231 + $0x48] sm:$0xff]
    %v2242 = vld [vmem:[%s2231 + $0x50] sm:$0xff]
    %v2243 = vld [vmem:[%s2231 + $0x58] sm:$0xff]
    %v2244 = vld [vmem:[%s2231 + $0x60] sm:$0xff]
    %v2245 = vld [vmem:[%s2231 + $0x68] sm:$0xff]
    %v2246 = vld [vmem:[%s2231 + $0x70] sm:$0xff]
    %v2247 = vld [vmem:[%s2231 + $0x78] sm:$0xff]
    %v2248 = vld [vmem:[%s2231 + $0x80] sm:$0xff]
    %v2249 = vld [vmem:[%s2231 + $0x88] sm:$0xff]
    %v2250 = vld [vmem:[%s2231 + $0x90] sm:$0xff]
    %v2251 = vld [vmem:[%s2231 + $0x98] sm:$0xff]
    %v2252 = vld [vmem:[%s2231 + $0xa0] sm:$0xff]
    %v2253 = vld [vmem:[%s2231 + $0xa8] sm:$0xff]
    %v2254 = vld [vmem:[%s2231 + $0xb0] sm:$0xff]
    %v2255 = vld [vmem:[%s2231 + $0xb8] sm:$0xff]
    %v2256 = vld [vmem:[%s2231 + $0xc0] sm:$0xff]
    %v2257 = vld [vmem:[%s2231 + $0xc8] sm:$0xff]
    %v2258 = vld [vmem:[%s2231 + $0xd0] sm:$0xff]
    %v2259 = vld [vmem:[%s2231 + $0xd8] sm:$0xff]
    %v2260 = vld [vmem:[%s2231 + $0xe0] sm:$0xff]
    %v2261 = vld [vmem:[%s2231 + $0xe8] sm:$0xff]
    %v2262 = vld [vmem:[%s2231 + $0xf0] sm:$0xff]
    %v2263 = vld [vmem:[%s2231 + $0xf8] sm:$0xff]
    %v2296 = vunpack.c.l.b16 %v2232
    %v2297 = vunpack.c.h.b16 %v2232
    %v2298 = vunpack.c.l.b16 %v2233
    %v2299 = vunpack.c.h.b16 %v2233
    %v2300 = vunpack.c.l.b16 %v2234
    %v2301 = vunpack.c.h.b16 %v2234
    %v2302 = vunpack.c.l.b16 %v2235
    %v2303 = vunpack.c.h.b16 %v2235
    %v2304 = vunpack.c.l.b16 %v2236
    %v2305 = vunpack.c.h.b16 %v2236
    %v2306 = vunpack.c.l.b16 %v2237
    %v2307 = vunpack.c.h.b16 %v2237
    %v2308 = vunpack.c.l.b16 %v2238
    %v2309 = vunpack.c.h.b16 %v2238
    %v2310 = vunpack.c.l.b16 %v2239
    %v2311 = vunpack.c.h.b16 %v2239
    %v2312 = vunpack.c.l.b16 %v2240
    %v2313 = vunpack.c.h.b16 %v2240
    %v2314 = vunpack.c.l.b16 %v2241
    %v2315 = vunpack.c.h.b16 %v2241
    %v2316 = vunpack.c.l.b16 %v2242
    %v2317 = vunpack.c.h.b16 %v2242
    %v2318 = vunpack.c.l.b16 %v2243
    %v2319 = vunpack.c.h.b16 %v2243
    %v2320 = vunpack.c.l.b16 %v2244
    %v2321 = vunpack.c.h.b16 %v2244
    %v2322 = vunpack.c.l.b16 %v2245
    %v2323 = vunpack.c.h.b16 %v2245
    %v2324 = vunpack.c.l.b16 %v2246
    %v2325 = vunpack.c.h.b16 %v2246
    %v2326 = vunpack.c.l.b16 %v2247
    %v2327 = vunpack.c.h.b16 %v2247
    %v2328 = vunpack.c.l.b16 %v2248
    %v2329 = vunpack.c.h.b16 %v2248
    %v2330 = vunpack.c.l.b16 %v2249
    %v2331 = vunpack.c.h.b16 %v2249
    %v2332 = vunpack.c.l.b16 %v2250
    %v2333 = vunpack.c.h.b16 %v2250
    %v2334 = vunpack.c.l.b16 %v2251
    %v2335 = vunpack.c.h.b16 %v2251
    %v2336 = vunpack.c.l.b16 %v2252
    %v2337 = vunpack.c.h.b16 %v2252
    %v2338 = vunpack.c.l.b16 %v2253
    %v2339 = vunpack.c.h.b16 %v2253
    %v2340 = vunpack.c.l.b16 %v2254
    %v2341 = vunpack.c.h.b16 %v2254
    %v2342 = vunpack.c.l.b16 %v2255
    %v2343 = vunpack.c.h.b16 %v2255
    %v2344 = vunpack.c.l.b16 %v2256
    %v2345 = vunpack.c.h.b16 %v2256
    %v2346 = vunpack.c.l.b16 %v2257
    %v2347 = vunpack.c.h.b16 %v2257
    %v2348 = vunpack.c.l.b16 %v2258
    %v2349 = vunpack.c.h.b16 %v2258
    %v2350 = vunpack.c.l.b16 %v2259
    %v2351 = vunpack.c.h.b16 %v2259
    %v2352 = vunpack.c.l.b16 %v2260
    %v2353 = vunpack.c.h.b16 %v2260
    %v2354 = vunpack.c.l.b16 %v2261
    %v2355 = vunpack.c.h.b16 %v2261
    %v2356 = vunpack.c.l.b16 %v2262
    %v2357 = vunpack.c.h.b16 %v2262
    %v2358 = vunpack.c.l.b16 %v2263
    %v2359 = vunpack.c.h.b16 %v2263
    %v2360 = vpack.c.b16 %v2298, %v2296
    %v2361 = vpack.c.b16 %v2299, %v2297
    %v2362 = vpack.c.b16 %v2302, %v2300
    %v2363 = vpack.c.b16 %v2303, %v2301
    %v2364 = vpack.c.b16 %v2306, %v2304
    %v2365 = vpack.c.b16 %v2307, %v2305
    %v2366 = vpack.c.b16 %v2310, %v2308
    %v2367 = vpack.c.b16 %v2311, %v2309
    %v2368 = vpack.c.b16 %v2314, %v2312
    %v2369 = vpack.c.b16 %v2315, %v2313
    %v2370 = vpack.c.b16 %v2318, %v2316
    %v2371 = vpack.c.b16 %v2319, %v2317
    %v2372 = vpack.c.b16 %v2322, %v2320
    %v2373 = vpack.c.b16 %v2323, %v2321
    %v2374 = vpack.c.b16 %v2326, %v2324
    %v2375 = vpack.c.b16 %v2327, %v2325
    %v2376 = vpack.c.b16 %v2330, %v2328
    %v2377 = vpack.c.b16 %v2331, %v2329
    %v2378 = vpack.c.b16 %v2334, %v2332
    %v2379 = vpack.c.b16 %v2335, %v2333
    %v2380 = vpack.c.b16 %v2338, %v2336
    %v2381 = vpack.c.b16 %v2339, %v2337
    %v2382 = vpack.c.b16 %v2342, %v2340
    %v2383 = vpack.c.b16 %v2343, %v2341
    %v2384 = vpack.c.b16 %v2346, %v2344
    %v2385 = vpack.c.b16 %v2347, %v2345
    %v2386 = vpack.c.b16 %v2350, %v2348
    %v2387 = vpack.c.b16 %v2351, %v2349
    %v2388 = vpack.c.b16 %v2354, %v2352
    %v2389 = vpack.c.b16 %v2355, %v2353
    %v2390 = vpack.c.b16 %v2358, %v2356
    %v2391 = vpack.c.b16 %v2359, %v2357
    %2424 = vmatprep.subr.bf16.mxu0 %v2361
    %2425 = vmatpush1.bf16.msra.mxu0 %v2360
    %2426 = vmatprep.subr.bf16.mxu0 %v2363
    %2427 = vmatpush1.bf16.msra.mxu0 %v2362
    %2428 = vmatprep.subr.bf16.mxu0 %v2365
    %2429 = vmatpush1.bf16.msra.mxu0 %v2364
    %2430 = vmatprep.subr.bf16.mxu0 %v2367
    %2431 = vmatpush1.bf16.msra.mxu0 %v2366
    %2432 = vmatprep.subr.bf16.mxu0 %v2369
    %2433 = vmatpush1.bf16.msra.mxu0 %v2368
    %2434 = vmatprep.subr.bf16.mxu0 %v2371
    %2435 = vmatpush1.bf16.msra.mxu0 %v2370
    %2436 = vmatprep.subr.bf16.mxu0 %v2373
    %2437 = vmatpush1.bf16.msra.mxu0 %v2372
    %2438 = vmatprep.subr.bf16.mxu0 %v2375
    %2439 = vmatpush1.bf16.msra.mxu0 %v2374
    %2440 = vmatprep.subr.bf16.mxu0 %v2377
    %2441 = vmatpush1.bf16.msra.mxu0 %v2376
    %2442 = vmatprep.subr.bf16.mxu0 %v2379
    %2443 = vmatpush1.bf16.msra.mxu0 %v2378
    %2444 = vmatprep.subr.bf16.mxu0 %v2381
    %2445 = vmatpush1.bf16.msra.mxu0 %v2380
    %2446 = vmatprep.subr.bf16.mxu0 %v2383
    %2447 = vmatpush1.bf16.msra.mxu0 %v2382
    %2448 = vmatprep.subr.bf16.mxu0 %v2385
    %2449 = vmatpush1.bf16.msra.mxu0 %v2384
    %2450 = vmatprep.subr.bf16.mxu0 %v2387
    %2451 = vmatpush1.bf16.msra.mxu0 %v2386
    %2452 = vmatprep.subr.bf16.mxu0 %v2389
    %2453 = vmatpush1.bf16.msra.mxu0 %v2388
    %2454 = vmatprep.subr.bf16.mxu0 %v2391
    %2455 = vmatpush1.bf16.msra.mxu0 %v2390
    %2456 = vmatprep.mubr.bf16.mxu0 %v1084
    %2457 = vmatmul.mubr.bf16.gmra.mrb[0].mxu0 %v1083
    %v2458 = vpop.f32.mrb[0].mxu0
    %v2459 = vadd.f32 0.0, %v2458
    %v2460 = vpop.f32.mrb[0].mxu0
    %v2461 = vadd.f32 0.0, %v2460
    %v2462 = vpop.f32.mrb[0].mxu0
    %v2463 = vadd.f32 0.0, %v2462
    %v2464 = vpop.f32.mrb[0].mxu0
    %v2465 = vadd.f32 0.0, %v2464
    %2466 = vmatprep.mubr.bf16.mxu0 %v1086
    %2467 = vmatmul.mubr.bf16.gmra.mrb[0].mxu0 %v1085
    %v2468 = vpop.f32.mrb[0].mxu0
    %v2469 = vadd.f32 0.0, %v2468
    %v2470 = vpop.f32.mrb[0].mxu0
    %v2471 = vadd.f32 0.0, %v2470
    %v2472 = vpop.f32.mrb[0].mxu0
    %v2473 = vadd.f32 0.0, %v2472
    %v2474 = vpop.f32.mrb[0].mxu0
    %v2475 = vadd.f32 0.0, %v2474
    %2476 = vmatprep.mubr.bf16.mxu0 %v1088
    %2477 = vmatmul.mubr.bf16.gmra.mrb[0].mxu0 %v1087
    %v2478 = vpop.f32.mrb[0].mxu0
    %v2479 = vadd.f32 0.0, %v2478
    %v2480 = vpop.f32.mrb[0].mxu0
    %v2481 = vadd.f32 0.0, %v2480
    %v2482 = vpop.f32.mrb[0].mxu0
    %v2483 = vadd.f32 0.0, %v2482
    %v2484 = vpop.f32.mrb[0].mxu0
    %v2485 = vadd.f32 0.0, %v2484
    %2486 = vmatprep.mubr.bf16.mxu0 %v1090
    %2487 = vmatmul.mubr.bf16.gmra.mrb[0].mxu0 %v1089
    %v2488 = vpop.f32.mrb[0].mxu0
    %v2489 = vadd.f32 0.0, %v2488
    %v2490 = vpop.f32.mrb[0].mxu0
    %v2491 = vadd.f32 0.0, %v2490
    %v2492 = vpop.f32.mrb[0].mxu0
    %v2493 = vadd.f32 0.0, %v2492
    %v2494 = vpop.f32.mrb[0].mxu0
    %v2495 = vadd.f32 0.0, %v2494
    %2496 = vdwg.mxu0
    %v2497 = vadd.f32 %v2215, %v2459
    %v2498 = vadd.f32 %v2216, %v2461
    %v2499 = vadd.f32 %v2217, %v2463
    %v2500 = vadd.f32 %v2218, %v2465
    %v2501 = vadd.f32 %v2219, %v2469
    %v2502 = vadd.f32 %v2220, %v2471
    %v2503 = vadd.f32 %v2221, %v2473
    %v2504 = vadd.f32 %v2222, %v2475
    %v2505 = vadd.f32 %v2223, %v2479
    %v2506 = vadd.f32 %v2224, %v2481
    %v2507 = vadd.f32 %v2225, %v2483
    %v2508 = vadd.f32 %v2226, %v2485
    %v2509 = vadd.f32 %v2227, %v2489
    %v2510 = vadd.f32 %v2228, %v2491
    %v2511 = vadd.f32 %v2229, %v2493
    %v2512 = vadd.f32 %v2230, %v2495
    %v2513 = vld [vmem:[%s4] sm:$0x3]
    %v2515 = vlaneseq
    %v2516 = vshrl.u32 %v2515, 7
    %v2517 = vsub.s32 0, %v2516
    %v2518 = vrot.slane %v2513, %v2517
    %v2519 = vlaneseq
    %v2520 = vshrl.u32 %v2519, 7
    %v2521 = vsub.s32 1, %v2520
    %v2522 = vrot.slane %v2513, %v2521
    %v2525 = vadd.f32 %v2497, %v2518
    %v2526 = vadd.f32 %v2498, %v2522
    %v2527 = vadd.f32 %v2499, %v2518
    %v2528 = vadd.f32 %v2500, %v2522
    %v2529 = vadd.f32 %v2501, %v2518
    %v2530 = vadd.f32 %v2502, %v2522
    %v2531 = vadd.f32 %v2503, %v2518
    %v2532 = vadd.f32 %v2504, %v2522
    %v2533 = vadd.f32 %v2505, %v2518
    %v2534 = vadd.f32 %v2506, %v2522
    %v2535 = vadd.f32 %v2507, %v2518
    %v2536 = vadd.f32 %v2508, %v2522
    %v2537 = vadd.f32 %v2509, %v2518
    %v2538 = vadd.f32 %v2510, %v2522
    %v2539 = vadd.f32 %v2511, %v2518
    %v2540 = vadd.f32 %v2512, %v2522
    %v2541 = vmax.f32 %v2525, %v2526
    %v2542 = vmax.f32 %v2527, %v2528
    %v2543 = vmax.f32 %v2529, %v2530
    %v2544 = vmax.f32 %v2531, %v2532
    %v2545 = vmax.f32 %v2533, %v2534
    %v2546 = vmax.f32 %v2535, %v2536
    %v2547 = vmax.f32 %v2537, %v2538
    %v2548 = vmax.f32 %v2539, %v2540
    %v2549 = vmax.f32 %v2541, %v2542
    %v2550 = vmax.f32 %v2543, %v2544
    %v2551 = vmax.f32 %v2545, %v2546
    %v2552 = vmax.f32 %v2547, %v2548
    %v2553 = vmax.f32 %v2549, 0.0
    %v2554 = vmax.f32 %v2550, 0.0
    %v2555 = vmax.f32 %v2551, 0.0
    %v2556 = vmax.f32 %v2552, 0.0
    %v2557 = vpack.c.bf16 %v2554, %v2553
    %v2558 = vpack.c.bf16 %v2556, %v2555
    %v2559 = vld [vmem:[#allocation6] sm:$0xf]
    %v2560 = vld [vmem:[#allocation6 + $0x4] sm:$0xf]
    %v2561 = vld [vmem:[#allocation6 + $0x8] sm:$0xf]
    %v2562 = vld [vmem:[#allocation6 + $0xc] sm:$0xf]
    %v2563 = vld [vmem:[#allocation6 + $0x10] sm:$0xf]
    %v2564 = vld [vmem:[#allocation6 + $0x14] sm:$0xf]
    %v2565 = vld [vmem:[#allocation6 + $0x18] sm:$0xf]
    %v2566 = vld [vmem:[#allocation6 + $0x1c] sm:$0xf]
    %v2567 = vld [vmem:[#allocation6 + $0x20] sm:$0xf]
    %v2568 = vld [vmem:[#allocation6 + $0x24] sm:$0xf]
    %v2569 = vld [vmem:[#allocation6 + $0x28] sm:$0xf]
    %v2570 = vld [vmem:[#allocation6 + $0x2c] sm:$0xf]
    %v2571 = vld [vmem:[#allocation6 + $0x30] sm:$0xf]
    %v2572 = vld [vmem:[#allocation6 + $0x34] sm:$0xf]
    %v2573 = vld [vmem:[#allocation6 + $0x38] sm:$0xf]
    %v2574 = vld [vmem:[#allocation6 + $0x3c] sm:$0xf]
    %s2575 = scalar_lea.vmem [#allocation6], 64
    %v2576 = vld [vmem:[%s2575] sm:$0xf]
    %v2577 = vld [vmem:[%s2575 + $0x4] sm:$0xf]
    %v2578 = vld [vmem:[%s2575 + $0x8] sm:$0xf]
    %v2579 = vld [vmem:[%s2575 + $0xc] sm:$0xf]
    %v2580 = vld [vmem:[%s2575 + $0x10] sm:$0xf]
    %v2581 = vld [vmem:[%s2575 + $0x14] sm:$0xf]
    %v2582 = vld [vmem:[%s2575 + $0x18] sm:$0xf]
    %v2583 = vld [vmem:[%s2575 + $0x1c] sm:$0xf]
    %v2584 = vld [vmem:[%s2575 + $0x20] sm:$0xf]
    %v2585 = vld [vmem:[%s2575 + $0x24] sm:$0xf]
    %v2586 = vld [vmem:[%s2575 + $0x28] sm:$0xf]
    %v2587 = vld [vmem:[%s2575 + $0x2c] sm:$0xf]
    %v2588 = vld [vmem:[%s2575 + $0x30] sm:$0xf]
    %v2589 = vld [vmem:[%s2575 + $0x34] sm:$0xf]
    %v2590 = vld [vmem:[%s2575 + $0x38] sm:$0xf]
    %v2591 = vld [vmem:[%s2575 + $0x3c] sm:$0xf]
    %v2593 = vrot.slane %v2557, 4
    %v2611 = vunpack.c.l.b16 %v2576
    %v2612 = vunpack.c.l.b16 %v2577
    %v2613 = vunpack.c.l.b16 %v2578
    %v2614 = vunpack.c.l.b16 %v2579
    %v2615 = vunpack.c.l.b16 %v2580
    %v2616 = vunpack.c.l.b16 %v2581
    %v2617 = vunpack.c.l.b16 %v2582
    %v2618 = vunpack.c.l.b16 %v2583
    %v2619 = vunpack.c.l.b16 %v2584
    %v2620 = vunpack.c.l.b16 %v2585
    %v2621 = vunpack.c.l.b16 %v2586
    %v2622 = vunpack.c.l.b16 %v2587
    %v2623 = vunpack.c.l.b16 %v2588
    %v2624 = vunpack.c.l.b16 %v2589
    %v2625 = vunpack.c.l.b16 %v2590
    %v2626 = vunpack.c.l.b16 %v2591
    %v2627 = vpack.c.b16 %v2612, %v2611
    %v2628 = vpack.c.b16 %v2614, %v2613
    %v2629 = vpack.c.b16 %v2616, %v2615
    %v2630 = vpack.c.b16 %v2618, %v2617
    %v2631 = vpack.c.b16 %v2620, %v2619
    %v2632 = vpack.c.b16 %v2622, %v2621
    %v2633 = vpack.c.b16 %v2624, %v2623
    %v2634 = vpack.c.b16 %v2626, %v2625
    %2643 = vmatprep.subr.bf16.mxu0 0
    %2644 = vmatpush1.bf16.msra.mxu0 %v2627
    %2645 = vmatprep.subr.bf16.mxu0 0
    %2646 = vmatpush1.bf16.msra.mxu0 %v2628
    %2647 = vmatprep.subr.bf16.mxu0 0
    %2648 = vmatpush1.bf16.msra.mxu0 %v2629
    %2649 = vmatprep.subr.bf16.mxu0 0
    %2650 = vmatpush1.bf16.msra.mxu0 %v2630
    %2651 = vmatprep.subr.bf16.mxu0 0
    %2652 = vmatpush1.bf16.msra.mxu0 %v2631
    %2653 = vmatprep.subr.bf16.mxu0 0
    %2654 = vmatpush1.bf16.msra.mxu0 %v2632
    %2655 = vmatprep.subr.bf16.mxu0 0
    %2656 = vmatpush1.bf16.msra.mxu0 %v2633
    %2657 = vmatprep.subr.bf16.mxu0 0
    %2658 = vmatpush1.bf16.msra.mxu0 %v2634
    %2659 = vmatprep.subr.bf16.mxu0 0
    %2660 = vmatpush1.bf16.msra.mxu0 0
    %2661 = vmatprep.subr.bf16.mxu0 0
    %2662 = vmatpush1.bf16.msra.mxu0 0
    %2663 = vmatprep.subr.bf16.mxu0 0
    %2664 = vmatpush1.bf16.msra.mxu0 0
    %2665 = vmatprep.subr.bf16.mxu0 0
    %2666 = vmatpush1.bf16.msra.mxu0 0
    %2667 = vmatprep.subr.bf16.mxu0 0
    %2668 = vmatpush1.bf16.msra.mxu0 0
    %2669 = vmatprep.subr.bf16.mxu0 0
    %2670 = vmatpush1.bf16.msra.mxu0 0
    %2671 = vmatprep.subr.bf16.mxu0 0
    %2672 = vmatpush1.bf16.msra.mxu0 0
    %2673 = vmatprep.subr.bf16.mxu0 0
    %2674 = vmatpush1.bf16.msra.mxu0 0
    %2675 = vmatprep.mubr.bf16.mxu0 0
    %2676 = vmatmul.mubr.bf16.gmra.mrb[0].mxu0 %v2593
    %v2677 = vpop.f32.mrb[0].mxu0
    %v2678 = vadd.f32 0.0, %v2677
    %v2679 = vpop.f32.mrb[0].mxu0
    %v2680 = vpop.f32.mrb[0].mxu0
    %v2681 = vpop.f32.mrb[0].mxu0
    %2682 = vdwg.mxu0
    %v2699 = vunpack.c.l.b16 %v2559
    %v2700 = vunpack.c.l.b16 %v2560
    %v2701 = vunpack.c.l.b16 %v2561
    %v2702 = vunpack.c.l.b16 %v2562
    %v2703 = vunpack.c.l.b16 %v2563
    %v2704 = vunpack.c.l.b16 %v2564
    %v2705 = vunpack.c.l.b16 %v2565
    %v2706 = vunpack.c.l.b16 %v2566
    %v2707 = vunpack.c.l.b16 %v2567
    %v2708 = vunpack.c.l.b16 %v2568
    %v2709 = vunpack.c.l.b16 %v2569
    %v2710 = vunpack.c.l.b16 %v2570
    %v2711 = vunpack.c.l.b16 %v2571
    %v2712 = vunpack.c.l.b16 %v2572
    %v2713 = vunpack.c.l.b16 %v2573
    %v2714 = vunpack.c.l.b16 %v2574
    %v2715 = vpack.c.b16 %v2700, %v2699
    %v2716 = vpack.c.b16 %v2702, %v2701
    %v2717 = vpack.c.b16 %v2704, %v2703
    %v2718 = vpack.c.b16 %v2706, %v2705
    %v2719 = vpack.c.b16 %v2708, %v2707
    %v2720 = vpack.c.b16 %v2710, %v2709
    %v2721 = vpack.c.b16 %v2712, %v2711
    %v2722 = vpack.c.b16 %v2714, %v2713
    %2731 = vmatprep.subr.bf16.mxu0 0
    %2732 = vmatpush1.bf16.msra.mxu0 %v2715
    %2733 = vmatprep.subr.bf16.mxu0 0
    %2734 = vmatpush1.bf16.msra.mxu0 %v2716
    %2735 = vmatprep.subr.bf16.mxu0 0
    %2736 = vmatpush1.bf16.msra.mxu0 %v2717
    %2737 = vmatprep.subr.bf16.mxu0 0
    %2738 = vmatpush1.bf16.msra.mxu0 %v2718
    %2739 = vmatprep.subr.bf16.mxu0 0
    %2740 = vmatpush1.bf16.msra.mxu0 %v2719
    %2741 = vmatprep.subr.bf16.mxu0 0
    %2742 = vmatpush1.bf16.msra.mxu0 %v2720
    %2743 = vmatprep.subr.bf16.mxu0 0
    %2744 = vmatpush1.bf16.msra.mxu0 %v2721
    %2745 = vmatprep.subr.bf16.mxu0 0
    %2746 = vmatpush1.bf16.msra.mxu0 %v2722
    %2747 = vmatprep.subr.bf16.mxu0 0
    %2748 = vmatpush1.bf16.msra.mxu0 0
    %2749 = vmatprep.subr.bf16.mxu0 0
    %2750 = vmatpush1.bf16.msra.mxu0 0
    %2751 = vmatprep.subr.bf16.mxu0 0
    %2752 = vmatpush1.bf16.msra.mxu0 0
    %2753 = vmatprep.subr.bf16.mxu0 0
    %2754 = vmatpush1.bf16.msra.mxu0 0
    %2755 = vmatprep.subr.bf16.mxu0 0
    %2756 = vmatpush1.bf16.msra.mxu0 0
    %2757 = vmatprep.subr.bf16.mxu0 0
    %2758 = vmatpush1.bf16.msra.mxu0 0
    %2759 = vmatprep.subr.bf16.mxu0 0
    %2760 = vmatpush1.bf16.msra.mxu0 0
    %2761 = vmatprep.subr.bf16.mxu0 0
    %2762 = vmatpush1.bf16.msra.mxu0 0
    %2763 = vmatprep.mubr.bf16.mxu0 0
    %2764 = vmatmul.mubr.bf16.gmra.mrb[0].mxu0 %v2557
    %v2765 = vpop.f32.mrb[0].mxu0
    %v2766 = vadd.f32 %v2678, %v2765
    %v2767 = vpop.f32.mrb[0].mxu0
    %v2768 = vpop.f32.mrb[0].mxu0
    %v2769 = vpop.f32.mrb[0].mxu0
    %2770 = vdwg.mxu0
    %s2771 = scalar_lea.vmem [#allocation6], 128
    %v2772 = vld [vmem:[%s2771] sm:$0xf]
    %v2773 = vld [vmem:[%s2771 + $0x4] sm:$0xf]
    %v2774 = vld [vmem:[%s2771 + $0x8] sm:$0xf]
    %v2775 = vld [vmem:[%s2771 + $0xc] sm:$0xf]
    %v2776 = vld [vmem:[%s2771 + $0x10] sm:$0xf]
    %v2777 = vld [vmem:[%s2771 + $0x14] sm:$0xf]
    %v2778 = vld [vmem:[%s2771 + $0x18] sm:$0xf]
    %v2779 = vld [vmem:[%s2771 + $0x1c] sm:$0xf]
    %v2780 = vld [vmem:[%s2771 + $0x20] sm:$0xf]
    %v2781 = vld [vmem:[%s2771 + $0x24] sm:$0xf]
    %v2782 = vld [vmem:[%s2771 + $0x28] sm:$0xf]
    %v2783 = vld [vmem:[%s2771 + $0x2c] sm:$0xf]
    %v2784 = vld [vmem:[%s2771 + $0x30] sm:$0xf]
    %v2785 = vld [vmem:[%s2771 + $0x34] sm:$0xf]
    %v2786 = vld [vmem:[%s2771 + $0x38] sm:$0xf]
    %v2787 = vld [vmem:[%s2771 + $0x3c] sm:$0xf]
    %v2804 = vunpack.c.l.b16 %v2772
    %v2805 = vunpack.c.l.b16 %v2773
    %v2806 = vunpack.c.l.b16 %v2774
    %v2807 = vunpack.c.l.b16 %v2775
    %v2808 = vunpack.c.l.b16 %v2776
    %v2809 = vunpack.c.l.b16 %v2777
    %v2810 = vunpack.c.l.b16 %v2778
    %v2811 = vunpack.c.l.b16 %v2779
    %v2812 = vunpack.c.l.b16 %v2780
    %v2813 = vunpack.c.l.b16 %v2781
    %v2814 = vunpack.c.l.b16 %v2782
    %v2815 = vunpack.c.l.b16 %v2783
    %v2816 = vunpack.c.l.b16 %v2784
    %v2817 = vunpack.c.l.b16 %v2785
    %v2818 = vunpack.c.l.b16 %v2786
    %v2819 = vunpack.c.l.b16 %v2787
    %v2820 = vpack.c.b16 %v2805, %v2804
    %v2821 = vpack.c.b16 %v2807, %v2806
    %v2822 = vpack.c.b16 %v2809, %v2808
    %v2823 = vpack.c.b16 %v2811, %v2810
    %v2824 = vpack.c.b16 %v2813, %v2812
    %v2825 = vpack.c.b16 %v2815, %v2814
    %v2826 = vpack.c.b16 %v2817, %v2816
    %v2827 = vpack.c.b16 %v2819, %v2818
    %2836 = vmatprep.subr.bf16.mxu0 0
    %2837 = vmatpush1.bf16.msra.mxu0 %v2820
    %2838 = vmatprep.subr.bf16.mxu0 0
    %2839 = vmatpush1.bf16.msra.mxu0 %v2821
    %2840 = vmatprep.subr.bf16.mxu0 0
    %2841 = vmatpush1.bf16.msra.mxu0 %v2822
    %2842 = vmatprep.subr.bf16.mxu0 0
    %2843 = vmatpush1.bf16.msra.mxu0 %v2823
    %2844 = vmatprep.subr.bf16.mxu0 0
    %2845 = vmatpush1.bf16.msra.mxu0 %v2824
    %2846 = vmatprep.subr.bf16.mxu0 0
    %2847 = vmatpush1.bf16.msra.mxu0 %v2825
    %2848 = vmatprep.subr.bf16.mxu0 0
    %2849 = vmatpush1.bf16.msra.mxu0 %v2826
    %2850 = vmatprep.subr.bf16.mxu0 0
    %2851 = vmatpush1.bf16.msra.mxu0 %v2827
    %2852 = vmatprep.subr.bf16.mxu0 0
    %2853 = vmatpush1.bf16.msra.mxu0 0
    %2854 = vmatprep.subr.bf16.mxu0 0
    %2855 = vmatpush1.bf16.msra.mxu0 0
    %2856 = vmatprep.subr.bf16.mxu0 0
    %2857 = vmatpush1.bf16.msra.mxu0 0
    %2858 = vmatprep.subr.bf16.mxu0 0
    %2859 = vmatpush1.bf16.msra.mxu0 0
    %2860 = vmatprep.subr.bf16.mxu0 0
    %2861 = vmatpush1.bf16.msra.mxu0 0
    %2862 = vmatprep.subr.bf16.mxu0 0
    %2863 = vmatpush1.bf16.msra.mxu0 0
    %2864 = vmatprep.subr.bf16.mxu0 0
    %2865 = vmatpush1.bf16.msra.mxu0 0
    %2866 = vmatprep.subr.bf16.mxu0 0
    %2867 = vmatpush1.bf16.msra.mxu0 0
    %2868 = vmatprep.mubr.bf16.mxu0 0
    %2869 = vmatmul.mubr.bf16.gmra.mrb[0].mxu0 %v2558
    %v2870 = vpop.f32.mrb[0].mxu0
    %v2871 = vadd.f32 0.0, %v2870
    %v2872 = vpop.f32.mrb[0].mxu0
    %v2873 = vpop.f32.mrb[0].mxu0
    %v2874 = vpop.f32.mrb[0].mxu0
    %2875 = vdwg.mxu0
    %v2876 = vadd.f32 %v2766, %v2871
    %s2877 = scalar_lea.vmem [#allocation6], 192
    %v2878 = vld [vmem:[%s2877] sm:$0xf]
    %v2879 = vld [vmem:[%s2877 + $0x4] sm:$0xf]
    %v2880 = vld [vmem:[%s2877 + $0x8] sm:$0xf]
    %v2881 = vld [vmem:[%s2877 + $0xc] sm:$0xf]
    %v2882 = vld [vmem:[%s2877 + $0x10] sm:$0xf]
    %v2883 = vld [vmem:[%s2877 + $0x14] sm:$0xf]
    %v2884 = vld [vmem:[%s2877 + $0x18] sm:$0xf]
    %v2885 = vld [vmem:[%s2877 + $0x1c] sm:$0xf]
    %v2886 = vld [vmem:[%s2877 + $0x20] sm:$0xf]
    %v2887 = vld [vmem:[%s2877 + $0x24] sm:$0xf]
    %v2888 = vld [vmem:[%s2877 + $0x28] sm:$0xf]
    %v2889 = vld [vmem:[%s2877 + $0x2c] sm:$0xf]
    %v2890 = vld [vmem:[%s2877 + $0x30] sm:$0xf]
    %v2891 = vld [vmem:[%s2877 + $0x34] sm:$0xf]
    %v2892 = vld [vmem:[%s2877 + $0x38] sm:$0xf]
    %v2893 = vld [vmem:[%s2877 + $0x3c] sm:$0xf]
    %v2895 = vrot.slane %v2558, 4
    %v2913 = vunpack.c.l.b16 %v2878
    %v2914 = vunpack.c.l.b16 %v2879
    %v2915 = vunpack.c.l.b16 %v2880
    %v2916 = vunpack.c.l.b16 %v2881
    %v2917 = vunpack.c.l.b16 %v2882
    %v2918 = vunpack.c.l.b16 %v2883
    %v2919 = vunpack.c.l.b16 %v2884
    %v2920 = vunpack.c.l.b16 %v2885
    %v2921 = vunpack.c.l.b16 %v2886
    %v2922 = vunpack.c.l.b16 %v2887
    %v2923 = vunpack.c.l.b16 %v2888
    %v2924 = vunpack.c.l.b16 %v2889
    %v2925 = vunpack.c.l.b16 %v2890
    %v2926 = vunpack.c.l.b16 %v2891
    %v2927 = vunpack.c.l.b16 %v2892
    %v2928 = vunpack.c.l.b16 %v2893
    %v2929 = vpack.c.b16 %v2914, %v2913
    %v2930 = vpack.c.b16 %v2916, %v2915
    %v2931 = vpack.c.b16 %v2918, %v2917
    %v2932 = vpack.c.b16 %v2920, %v2919
    %v2933 = vpack.c.b16 %v2922, %v2921
    %v2934 = vpack.c.b16 %v2924, %v2923
    %v2935 = vpack.c.b16 %v2926, %v2925
    %v2936 = vpack.c.b16 %v2928, %v2927
    %2945 = vmatprep.subr.bf16.mxu0 0
    %2946 = vmatpush1.bf16.msra.mxu0 %v2929
    %2947 = vmatprep.subr.bf16.mxu0 0
    %2948 = vmatpush1.bf16.msra.mxu0 %v2930
    %2949 = vmatprep.subr.bf16.mxu0 0
    %2950 = vmatpush1.bf16.msra.mxu0 %v2931
    %2951 = vmatprep.subr.bf16.mxu0 0
    %2952 = vmatpush1.bf16.msra.mxu0 %v2932
    %2953 = vmatprep.subr.bf16.mxu0 0
    %2954 = vmatpush1.bf16.msra.mxu0 %v2933
    %2955 = vmatprep.subr.bf16.mxu0 0
    %2956 = vmatpush1.bf16.msra.mxu0 %v2934
    %2957 = vmatprep.subr.bf16.mxu0 0
    %2958 = vmatpush1.bf16.msra.mxu0 %v2935
    %2959 = vmatprep.subr.bf16.mxu0 0
    %2960 = vmatpush1.bf16.msra.mxu0 %v2936
    %2961 = vmatprep.subr.bf16.mxu0 0
    %2962 = vmatpush1.bf16.msra.mxu0 0
    %2963 = vmatprep.subr.bf16.mxu0 0
    %2964 = vmatpush1.bf16.msra.mxu0 0
    %2965 = vmatprep.subr.bf16.mxu0 0
    %2966 = vmatpush1.bf16.msra.mxu0 0
    %2967 = vmatprep.subr.bf16.mxu0 0
    %2968 = vmatpush1.bf16.msra.mxu0 0
    %2969 = vmatprep.subr.bf16.mxu0 0
    %2970 = vmatpush1.bf16.msra.mxu0 0
    %2971 = vmatprep.subr.bf16.mxu0 0
    %2972 = vmatpush1.bf16.msra.mxu0 0
    %2973 = vmatprep.subr.bf16.mxu0 0
    %2974 = vmatpush1.bf16.msra.mxu0 0
    %2975 = vmatprep.subr.bf16.mxu0 0
    %2976 = vmatpush1.bf16.msra.mxu0 0
    %2977 = vmatprep.mubr.bf16.mxu0 0
    %2978 = vmatmul.mubr.bf16.gmra.mrb[0].mxu0 %v2895
    %v2979 = vpop.f32.mrb[0].mxu0
    %v2980 = vadd.f32 0.0, %v2979
    %v2981 = vpop.f32.mrb[0].mxu0
    %v2982 = vpop.f32.mrb[0].mxu0
    %v2983 = vpop.f32.mrb[0].mxu0
    %2984 = vdwg.mxu0
    %v2985 = vadd.f32 %v2876, %v2980
    %v2986 = vld [vmem:[%s6] sm:$0x1]
    %v2988 = vlaneseq
    %v2989 = vshrl.u32 %v2988, 7
    %v2990 = vsub.s32 0, %v2989
    %v2991 = vrot.slane %v2986, %v2990
    %v2993 = vadd.f32 %v2985, %v2991
    %v2994 = vmax.f32 %v2993, 0.0
    %v2995 = vpack.c.bf16 %v2994, %v2994
    %v2996 = vld [vmem:[%s7] sm:$0xf]
    %v2997 = vld [vmem:[%s7 + $0x4] sm:$0xf]
    %v2998 = vld [vmem:[%s7 + $0x8] sm:$0xf]
    %v2999 = vld [vmem:[%s7 + $0xc] sm:$0xf]
    %v3000 = vld [vmem:[%s7 + $0x10] sm:$0xf]
    %v3001 = vld [vmem:[%s7 + $0x14] sm:$0xf]
    %v3002 = vld [vmem:[%s7 + $0x18] sm:$0xf]
    %v3003 = vld [vmem:[%s7 + $0x1c] sm:$0xf]
    %v3004 = vld [vmem:[%s7 + $0x20] sm:$0xf]
    %v3005 = vld [vmem:[%s7 + $0x24] sm:$0xf]
    %v3006 = vld [vmem:[%s7 + $0x28] sm:$0xf]
    %v3007 = vld [vmem:[%s7 + $0x2c] sm:$0xf]
    %v3008 = vld [vmem:[%s7 + $0x30] sm:$0xf]
    %v3009 = vld [vmem:[%s7 + $0x34] sm:$0xf]
    %v3010 = vld [vmem:[%s7 + $0x38] sm:$0xf]
    %v3011 = vld [vmem:[%s7 + $0x3c] sm:$0xf]
    %v3012 = vld [vmem:[%s8] sm:$0x1]
    %v3014 = vlaneseq
    %v3015 = vshrl.u32 %v3014, 7
    %v3016 = vsub.s32 0, %v3015
    %v3017 = vrot.slane %v3012, %v3016
    %v3035 = vunpack.c.l.b16 %v2996
    %v3036 = vunpack.c.l.b16 %v2997
    %v3037 = vunpack.c.l.b16 %v2998
    %v3038 = vunpack.c.l.b16 %v2999
    %v3039 = vunpack.c.l.b16 %v3000
    %v3040 = vunpack.c.l.b16 %v3001
    %v3041 = vunpack.c.l.b16 %v3002
    %v3042 = vunpack.c.l.b16 %v3003
    %v3043 = vunpack.c.l.b16 %v3004
    %v3044 = vunpack.c.l.b16 %v3005
    %v3045 = vunpack.c.l.b16 %v3006
    %v3046 = vunpack.c.l.b16 %v3007
    %v3047 = vunpack.c.l.b16 %v3008
    %v3048 = vunpack.c.l.b16 %v3009
    %v3049 = vunpack.c.l.b16 %v3010
    %v3050 = vunpack.c.l.b16 %v3011
    %v3051 = vpack.c.b16 %v3036, %v3035
    %v3052 = vpack.c.b16 %v3038, %v3037
    %v3053 = vpack.c.b16 %v3040, %v3039
    %v3054 = vpack.c.b16 %v3042, %v3041
    %v3055 = vpack.c.b16 %v3044, %v3043
    %v3056 = vpack.c.b16 %v3046, %v3045
    %v3057 = vpack.c.b16 %v3048, %v3047
    %v3058 = vpack.c.b16 %v3050, %v3049
    %3067 = vmatprep.subr.bf16.mxu0 0
    %3068 = vmatpush1.bf16.msra.mxu0 %v3051
    %3069 = vmatprep.subr.bf16.mxu0 0
    %3070 = vmatpush1.bf16.msra.mxu0 %v3052
    %3071 = vmatprep.subr.bf16.mxu0 0
    %3072 = vmatpush1.bf16.msra.mxu0 %v3053
    %3073 = vmatprep.subr.bf16.mxu0 0
    %3074 = vmatpush1.bf16.msra.mxu0 %v3054
    %3075 = vmatprep.subr.bf16.mxu0 0
    %3076 = vmatpush1.bf16.msra.mxu0 %v3055
    %3077 = vmatprep.subr.bf16.mxu0 0
    %3078 = vmatpush1.bf16.msra.mxu0 %v3056
    %3079 = vmatprep.subr.bf16.mxu0 0
    %3080 = vmatpush1.bf16.msra.mxu0 %v3057
    %3081 = vmatprep.subr.bf16.mxu0 0
    %3082 = vmatpush1.bf16.msra.mxu0 %v3058
    %3083 = vmatprep.subr.bf16.mxu0 0
    %3084 = vmatpush1.bf16.msra.mxu0 0
    %3085 = vmatprep.subr.bf16.mxu0 0
    %3086 = vmatpush1.bf16.msra.mxu0 0
    %3087 = vmatprep.subr.bf16.mxu0 0
    %3088 = vmatpush1.bf16.msra.mxu0 0
    %3089 = vmatprep.subr.bf16.mxu0 0
    %3090 = vmatpush1.bf16.msra.mxu0 0
    %3091 = vmatprep.subr.bf16.mxu0 0
    %3092 = vmatpush1.bf16.msra.mxu0 0
    %3093 = vmatprep.subr.bf16.mxu0 0
    %3094 = vmatpush1.bf16.msra.mxu0 0
    %3095 = vmatprep.subr.bf16.mxu0 0
    %3096 = vmatpush1.bf16.msra.mxu0 0
    %3097 = vmatprep.subr.bf16.mxu0 0
    %3098 = vmatpush1.bf16.msra.mxu0 0
    %3099 = vmatprep.mubr.bf16.mxu0 0
    %3100 = vmatmul.mubr.bf16.gmra.mrb[0].mxu0 %v2995
    %v3101 = vpop.f32.mrb[0].mxu0
    %v3102 = vadd.f32 %v3017, %v3101
    %v3103 = vpop.f32.mrb[0].mxu0
    %v3104 = vpop.f32.mrb[0].mxu0
    %v3105 = vpop.f32.mrb[0].mxu0
    %3106 = vdwg.mxu0
    %3107 = vmax.xlane.f32.xlu0 %v3102
    %v3108 = vpop.xlane.xlu0 %3107
    %v3109 = vsub.f32 %v3102, %v3108
    %v3110 = vmul.f32 %v3109, 1.442695
    %v3111 = vpow.pop %v3110
    %3112 = vadd.xlane.f32.xlu0 %v3111
    %v3113 = vpop.xlane.xlu0 %3112
    %v3114 = vlog2.pop %v3113
    %v3115 = vmul.f32 %v3114, 0.6931472
    %v3116 = vsub.f32 %v3109, %v3115
    %3117 = vst [vmem:[%s9] sm:$0xff] %v3116
    // Predicated region
    $region50: #{forward.1} parent=1 // pred_check
      _
    $region51: #{forward.1} parent=1 // pred_check_branch
      %3119 = sbr.rel (0) target = $region53
    $region52: #{forward.1} parent=1 // pred_region
      _
    $region53: #{forward.1} parent=1 // pred_fallthru
      _
    // Predicated region
    $region54: #{forward.1} parent=1 // pred_check
      _
    $region55: #{forward.1} parent=1 // pred_check_branch
      %3121 = sbr.rel (0) target = $region57
    $region56: #{forward.1} parent=1 // pred_region
      _
    $region57: #{forward.1} parent=1 // pred_fallthru
      _
    %3122 = vsyncpa [#allocation3], 1
    %3123 = vsyncpa [#allocation5], 1

</llo_original>
